<compile_context>
chip_gen: v5e
topology: v5e:2x2
jax: 0.10.0
libtpu: 0.0.40
codegen_flags: <defaults>
</compile_context>

<pallas_src>
import functools

import jax
import jax.numpy as jnp
from jax import lax
from jax.experimental import pallas as pl
from jax.experimental.pallas import tpu as pltpu

N_azimuth = 16
N_eccentricity = 8
N_phase = 2
N_theta = 6

IN_DIM = N_theta * N_azimuth * N_eccentricity * N_phase  # 1536
H1, H2, OUT = 200, 80, 10            # logical (PyTorch) feature widths
H1P, H2P, OUTP = 256, 128, 128       # padded, lane/MXU-friendly widths
DROP_P = 0.5


def _round_up(x, m):
    return (x + m - 1) // m * m


def _lsr16(v):
    # Logical shift right by 16 on int32 (arithmetic shift + mask of the
    # sign-extended upper bits).  Uses only vanilla int32 VPU ops.
    return (v >> 16) & jnp.int32(0xFFFF)


def _dropout_keep_mask(seed, row_off, shape):
    """Deterministic counter-based hash -> Bernoulli(0.5) keep mask.

    Pure int32 iota / mul / xor / shift ops: lowers on TPU (Mosaic) and in
    interpret mode alike.  `row_off` mixes the grid position in so different
    batch tiles get different masks.
    """
    r = lax.broadcasted_iota(jnp.int32, shape, 0) + row_off
    c = lax.broadcasted_iota(jnp.int32, shape, 1)
    k = r * jnp.int32(1000003) + c * jnp.int32(8191) + seed * jnp.int32(374761393)
    # Two rounds of the classic ((x >>> 16) ^ x) * 0x45d9f3b integer mixer.
    k = (_lsr16(k) ^ k) * jnp.int32(0x45D9F3B)
    k = (_lsr16(k) ^ k) * jnp.int32(0x45D9F3B)
    k = _lsr16(k) ^ k
    return (k & 1) == 0


def mlp_kernel(seed_ref,                                              # SMEM (scalar prefetch)
               x_ref, w1_ref, b1_ref, w2_ref, b2_ref, w3_ref, b3_ref,  # VMEM inputs
               o_ref,                                                 # VMEM output
               *, apply_dropout):
    x = x_ref[...]                                                    # (BT, 1536) bf16

    # bn1 + ReLU   (f32 accumulate, f32 bias)
    h1 = jnp.dot(x, w1_ref[...], preferred_element_type=jnp.float32) + b1_ref[...]
    h1 = jnp.maximum(h1, 0.0)

    # bn2 + ReLU
    h2 = jnp.dot(h1.astype(jnp.bfloat16), w2_ref[...],
                 preferred_element_type=jnp.float32) + b2_ref[...]
    h2 = jnp.maximum(h2, 0.0)

    # dropout(p=0.5), training semantics (inverted scaling by 1/(1-p)).
    if apply_dropout:
        row_off = pl.program_id(0) * x_ref.shape[0]
        keep = _dropout_keep_mask(seed_ref[0], row_off, h2.shape)
        h2 = jnp.where(keep, h2 * (1.0 / (1.0 - DROP_P)), 0.0)

    # bn3 (no activation); padded columns of w3/b3 are zero -> garbage-free.
    z = jnp.dot(h2.astype(jnp.bfloat16), w3_ref[...],
                preferred_element_type=jnp.float32) + b3_ref[...]
    o_ref[...] = z.astype(o_ref.dtype)


@functools.partial(jax.jit, static_argnames=("training",))
def net_forward(x, packed, seed, training=True):
    """x: (B, IN_DIM) float32; packed: output of pack_params; seed: int32."""
    B = x.shape[0]

    # Batch tile: multiple of 8 (sublanes), capped at 512 rows so double-buffered
    # bf16 x tiles + resident weights stay well inside the v5e scoped-VMEM budget.
    b_tile = min(512, _round_up(B, 8))
    b_pad = _round_up(B, b_tile)
    xb = jnp.pad(x, ((0, b_pad - B), (0, 0))).astype(jnp.bfloat16)

    kernel = functools.partial(mlp_kernel, apply_dropout=training)

    grid_spec = pltpu.PrefetchScalarGridSpec(
        num_scalar_prefetch=1,
        grid=(b_pad // b_tile,),
        in_specs=[
            # x: tiled over the batch grid axis.
            pl.BlockSpec((b_tile, IN_DIM), lambda i, s: (i, 0)),
            # Weights / biases: constant index_map -> VMEM-resident across steps.
            pl.BlockSpec((IN_DIM, H1P), lambda i, s: (0, 0)),
            pl.BlockSpec((1, H1P), lambda i, s: (0, 0)),
            pl.BlockSpec((H1P, H2P), lambda i, s: (0, 0)),
            pl.BlockSpec((1, H2P), lambda i, s: (0, 0)),
            pl.BlockSpec((H2P, OUTP), lambda i, s: (0, 0)),
            pl.BlockSpec((1, OUTP), lambda i, s: (0, 0)),
        ],
        out_specs=pl.BlockSpec((b_tile, OUTP), lambda i, s: (i, 0)),
    )

    z = pl.pallas_call(
        kernel,
        out_shape=jax.ShapeDtypeStruct((b_pad, OUTP), jnp.float32),
        grid_spec=grid_spec,
        compiler_params=pltpu.CompilerParams(
            dimension_semantics=("parallel",)),   # shards batch tiles across TCs on v7x
    )(jnp.reshape(jnp.asarray(seed, dtype=jnp.int32), (1,)),
      xb,
      packed["w1"], packed["b1"],
      packed["w2"], packed["b2"],
      packed["w3"], packed["b3"])

    return z[:B, :OUT]


def init_params(key):
    """PyTorch Linear default init: U(-k, k), k = 1/sqrt(fan_in).
    Weights stored as (in_features, out_features) so y = x @ W + b."""
    ks = jax.random.split(key, 6)

    def lin(kw, kb, fan_in, fan_out):
        bound = 1.0 / jnp.sqrt(float(fan_in))
        w = jax.random.uniform(kw, (fan_in, fan_out), jnp.float32, -bound, bound)
        b = jax.random.uniform(kb, (1, fan_out), jnp.float32, -bound, bound)
        return w, b

    w1, b1 = lin(ks[0], ks[1], IN_DIM, H1)
    w2, b2 = lin(ks[2], ks[3], H1, H2)
    w3, b3 = lin(ks[4], ks[5], H2, OUT)
    return {"w1": w1, "b1": b1, "w2": w2, "b2": b2, "w3": w3, "b3": b3}


def pack_params(params):
    """One-time padding to lane/MXU-friendly shapes + bf16 weight cast."""
    def padw(w, r, c):
        return jnp.pad(w, ((0, r - w.shape[0]), (0, c - w.shape[1]))).astype(jnp.bfloat16)

    def padb(b, c):
        return jnp.pad(b, ((0, 0), (0, c - b.shape[1]))).astype(jnp.float32)

    return {
        "w1": padw(params["w1"], IN_DIM, H1P), "b1": padb(params["b1"], H1P),
        "w2": padw(params["w2"], H1P, H2P),    "b2": padb(params["b2"], H2P),
        "w3": padw(params["w3"], H2P, OUTP),   "b3": padb(params["b3"], OUTP),
    }


def reference_forward(x, packed):
    """Plain-JAX reference (no dropout), using the same packed bf16 weights."""
    xb = x.astype(jnp.bfloat16)
    h1 = jnp.maximum(jnp.dot(xb, packed["w1"], preferred_element_type=jnp.float32)
                     + packed["b1"], 0.0)
    h2 = jnp.maximum(jnp.dot(h1.astype(jnp.bfloat16), packed["w2"],
                             preferred_element_type=jnp.float32) + packed["b2"], 0.0)
    z = jnp.dot(h2.astype(jnp.bfloat16), packed["w3"],
                preferred_element_type=jnp.float32) + packed["b3"]
    return z[:, :OUT]


if __name__ == "__main__":
    key = jax.random.PRNGKey(0)
    k_params, k_x = jax.random.split(key)

    params = init_params(k_params)
    packed = pack_params(params)

    B = 2
    x = jax.random.normal(k_x, (B, IN_DIM), dtype=jnp.float32)

    # Training-mode forward (dropout active), matching the PyTorch module's
    # default F.dropout(training=True) behaviour.
    z = net_forward(x, packed, seed=0, training=True)
    z = jax.block_until_ready(z)
    assert z.shape == (B, OUT) and z.dtype == jnp.float32
    assert bool(jnp.all(jnp.isfinite(z)))

    # Eval-mode (dropout off) cross-check against a plain-JAX reference.
    z_eval = jax.block_until_ready(net_forward(x, packed, seed=0, training=False))
    ref = reference_forward(x, packed)
    assert jnp.allclose(z_eval, ref, rtol=2e-2, atol=2e-2)

    print("KERNEL_OK")
</pallas_src>

<mosaic_0001>
module attributes {stable_mosaic.version = 11 : i64} {
  func.func @mlp_kernel(%arg0: i32, %arg1: memref<1xi32, #tpu.memory_space<smem>>, %arg2: memref<8x1536xbf16, #tpu.memory_space<vmem>>, %arg3: memref<1536x256xbf16, #tpu.memory_space<vmem>>, %arg4: memref<1x256xf32, #tpu.memory_space<vmem>>, %arg5: memref<256x128xbf16, #tpu.memory_space<vmem>>, %arg6: memref<1x128xf32, #tpu.memory_space<vmem>>, %arg7: memref<128x128xbf16, #tpu.memory_space<vmem>>, %arg8: memref<1x128xf32, #tpu.memory_space<vmem>>, %arg9: memref<8x128xf32, #tpu.memory_space<vmem>>) attributes {dimension_semantics = [#tpu.dimension_semantics<parallel>], iteration_bounds = array<i64: 1>, scalar_prefetch = 1 : i64, scratch_operands = 0 : i64, tpu.core_type = #tpu.core_type<tc>, window_params = [{transform_indices = @transform_0, window_bounds = array<i64: 8, 1536>}, {pipeline_mode = #tpu.pipeline_mode<synchronous>, transform_indices = @transform_1, window_bounds = array<i64: 1536, 256>}, {pipeline_mode = #tpu.pipeline_mode<synchronous>, transform_indices = @transform_2, window_bounds = array<i64: 1, 256>}, {pipeline_mode = #tpu.pipeline_mode<synchronous>, transform_indices = @transform_3, window_bounds = array<i64: 256, 128>}, {pipeline_mode = #tpu.pipeline_mode<synchronous>, transform_indices = @transform_4, window_bounds = array<i64: 1, 128>}, {pipeline_mode = #tpu.pipeline_mode<synchronous>, transform_indices = @transform_5, window_bounds = array<i64: 128, 128>}, {pipeline_mode = #tpu.pipeline_mode<synchronous>, transform_indices = @transform_6, window_bounds = array<i64: 1, 128>}, {transform_indices = @transform_7, window_bounds = array<i64: 8, 128>}]} {
    %c0 = arith.constant 0 : index
    %c0_0 = arith.constant 0 : index
    %0 = vector.load %arg2[%c0, %c0_0] : memref<8x1536xbf16, #tpu.memory_space<vmem>>, vector<8x1536xbf16>
    %c0_1 = arith.constant 0 : index
    %c0_2 = arith.constant 0 : index
    %1 = vector.load %arg3[%c0_1, %c0_2] : memref<1536x256xbf16, #tpu.memory_space<vmem>>, vector<1536x256xbf16>
    %cst = arith.constant dense<0.000000e+00> : vector<8x256xf32>
    %2 = tpu.matmul %0, %1, %cst {dimension_numbers = #tpu.dot_dimension_numbers<[1], [0], [0], [1], [0, 0, 1, 1], [], []>} : vector<8x1536xbf16>, vector<1536x256xbf16>, vector<8x256xf32> -> vector<8x256xf32>
    %c0_3 = arith.constant 0 : index
    %c0_4 = arith.constant 0 : index
    %3 = vector.load %arg4[%c0_3, %c0_4] : memref<1x256xf32, #tpu.memory_space<vmem>>, vector<1x256xf32>
    %4 = vector.broadcast %3 : vector<1x256xf32> to vector<8x256xf32>
    %5 = arith.addf %2, %4 : vector<8x256xf32>
    %cst_5 = arith.constant 0.000000e+00 : f32
    %6 = vector.broadcast %cst_5 : f32 to vector<8x256xf32>
    %7 = arith.maximumf %5, %6 : vector<8x256xf32>
    %8 = arith.truncf %7 : vector<8x256xf32> to vector<8x256xbf16>
    %c0_6 = arith.constant 0 : index
    %c0_7 = arith.constant 0 : index
    %9 = vector.load %arg5[%c0_6, %c0_7] : memref<256x128xbf16, #tpu.memory_space<vmem>>, vector<256x128xbf16>
    %cst_8 = arith.constant dense<0.000000e+00> : vector<8x128xf32>
    %10 = tpu.matmul %8, %9, %cst_8 {dimension_numbers = #tpu.dot_dimension_numbers<[1], [0], [0], [1], [0, 0, 1, 1], [], []>} : vector<8x256xbf16>, vector<256x128xbf16>, vector<8x128xf32> -> vector<8x128xf32>
    %c0_9 = arith.constant 0 : index
    %c0_10 = arith.constant 0 : index
    %11 = vector.load %arg6[%c0_9, %c0_10] : memref<1x128xf32, #tpu.memory_space<vmem>>, vector<1x128xf32>
    %12 = vector.broadcast %11 : vector<1x128xf32> to vector<8x128xf32>
    %13 = arith.addf %10, %12 : vector<8x128xf32>
    %cst_11 = arith.constant 0.000000e+00 : f32
    %14 = vector.broadcast %cst_11 : f32 to vector<8x128xf32>
    %15 = arith.maximumf %13, %14 : vector<8x128xf32>
    %c8_i32 = arith.constant 8 : i32
    %16 = arith.muli %arg0, %c8_i32 : i32
    %c0_12 = arith.constant 0 : index
    %17 = memref.load %arg1[%c0_12] : memref<1xi32, #tpu.memory_space<smem>>
    %18 = tpu.iota {dimensions = array<i32: 0>} : vector<8x128xi32>
    %19 = vector.broadcast %16 : i32 to vector<8x128xi32>
    %20 = arith.addi %18, %19 : vector<8x128xi32>
    %21 = tpu.iota {dimensions = array<i32: 1>} : vector<8x128xi32>
    %c1000003_i32 = arith.constant 1000003 : i32
    %22 = vector.broadcast %c1000003_i32 : i32 to vector<8x128xi32>
    %23 = arith.muli %20, %22 : vector<8x128xi32>
    %c8191_i32 = arith.constant 8191 : i32
    %24 = vector.broadcast %c8191_i32 : i32 to vector<8x128xi32>
    %25 = arith.muli %21, %24 : vector<8x128xi32>
    %26 = arith.addi %23, %25 : vector<8x128xi32>
    %c374761393_i32 = arith.constant 374761393 : i32
    %27 = arith.muli %17, %c374761393_i32 : i32
    %28 = vector.broadcast %27 : i32 to vector<8x128xi32>
    %29 = arith.addi %26, %28 : vector<8x128xi32>
    %c16_i32 = arith.constant 16 : i32
    %30 = vector.broadcast %c16_i32 : i32 to vector<8x128xi32>
    %31 = arith.shrsi %29, %30 : vector<8x128xi32>
    %c65535_i32 = arith.constant 65535 : i32
    %32 = vector.broadcast %c65535_i32 : i32 to vector<8x128xi32>
    %33 = arith.andi %31, %32 : vector<8x128xi32>
    %34 = arith.xori %33, %29 : vector<8x128xi32>
    %c73244475_i32 = arith.constant 73244475 : i32
    %35 = vector.broadcast %c73244475_i32 : i32 to vector<8x128xi32>
    %36 = arith.muli %34, %35 : vector<8x128xi32>
    %c16_i32_13 = arith.constant 16 : i32
    %37 = vector.broadcast %c16_i32_13 : i32 to vector<8x128xi32>
    %38 = arith.shrsi %36, %37 : vector<8x128xi32>
    %c65535_i32_14 = arith.constant 65535 : i32
    %39 = vector.broadcast %c65535_i32_14 : i32 to vector<8x128xi32>
    %40 = arith.andi %38, %39 : vector<8x128xi32>
    %41 = arith.xori %40, %36 : vector<8x128xi32>
    %c73244475_i32_15 = arith.constant 73244475 : i32
    %42 = vector.broadcast %c73244475_i32_15 : i32 to vector<8x128xi32>
    %43 = arith.muli %41, %42 : vector<8x128xi32>
    %c16_i32_16 = arith.constant 16 : i32
    %44 = vector.broadcast %c16_i32_16 : i32 to vector<8x128xi32>
    %45 = arith.shrsi %43, %44 : vector<8x128xi32>
    %c65535_i32_17 = arith.constant 65535 : i32
    %46 = vector.broadcast %c65535_i32_17 : i32 to vector<8x128xi32>
    %47 = arith.andi %45, %46 : vector<8x128xi32>
    %48 = arith.xori %47, %43 : vector<8x128xi32>
    %c1_i32 = arith.constant 1 : i32
    %49 = vector.broadcast %c1_i32 : i32 to vector<8x128xi32>
    %50 = arith.andi %48, %49 : vector<8x128xi32>
    %c0_i32 = arith.constant 0 : i32
    %51 = vector.broadcast %c0_i32 : i32 to vector<8x128xi32>
    %52 = arith.cmpi eq, %50, %51 : vector<8x128xi32>
    %cst_18 = arith.constant 2.000000e+00 : f32
    %53 = vector.broadcast %cst_18 : f32 to vector<8x128xf32>
    %54 = arith.mulf %15, %53 : vector<8x128xf32>
    %cst_19 = arith.constant 0.000000e+00 : f32
    %55 = vector.broadcast %cst_19 : f32 to vector<8x128xf32>
    %56 = arith.select %52, %54, %55 : vector<8x128xi1>, vector<8x128xf32>
    %57 = arith.truncf %56 : vector<8x128xf32> to vector<8x128xbf16>
    %c0_20 = arith.constant 0 : index
    %c0_21 = arith.constant 0 : index
    %58 = vector.load %arg7[%c0_20, %c0_21] : memref<128x128xbf16, #tpu.memory_space<vmem>>, vector<128x128xbf16>
    %cst_22 = arith.constant dense<0.000000e+00> : vector<8x128xf32>
    %59 = tpu.matmul %57, %58, %cst_22 {dimension_numbers = #tpu.dot_dimension_numbers<[1], [0], [0], [1], [0, 0, 1, 1], [], []>} : vector<8x128xbf16>, vector<128x128xbf16>, vector<8x128xf32> -> vector<8x128xf32>
    %c0_23 = arith.constant 0 : index
    %c0_24 = arith.constant 0 : index
    %60 = vector.load %arg8[%c0_23, %c0_24] : memref<1x128xf32, #tpu.memory_space<vmem>>, vector<1x128xf32>
    %61 = vector.broadcast %60 : vector<1x128xf32> to vector<8x128xf32>
    %62 = arith.addf %59, %61 : vector<8x128xf32>
    %c0_25 = arith.constant 0 : index
    %c0_26 = arith.constant 0 : index
    %63 = vector.load %arg9[%c0_25, %c0_26] : memref<8x128xf32, #tpu.memory_space<vmem>>, vector<8x128xf32>
    tpu.vector_store %arg9[%c0_25, %c0_26], %62 {strides = array<i32>} : memref<8x128xf32, #tpu.memory_space<vmem>>, vector<8x128xf32>,
    return
  }
  func.func @transform_0(%arg0: i32, %arg1: memref<1xi32, #tpu.memory_space<smem>>) -> (i32, i32) {
    %c0_i32 = arith.constant 0 : i32
    %c0_i32_0 = arith.constant 0 : i32
    return %arg0, %c0_i32 : i32, i32
  }
  func.func @transform_1(%arg0: i32, %arg1: memref<1xi32, #tpu.memory_space<smem>>) -> (i32, i32) {
    %c0_i32 = arith.constant 0 : i32
    %c0_i32_0 = arith.constant 0 : i32
    %c0_i32_1 = arith.constant 0 : i32
    return %c0_i32, %c0_i32_0 : i32, i32
  }
  func.func @transform_2(%arg0: i32, %arg1: memref<1xi32, #tpu.memory_space<smem>>) -> (i32, i32) {
    %c0_i32 = arith.constant 0 : i32
    %c0_i32_0 = arith.constant 0 : i32
    %c0_i32_1 = arith.constant 0 : i32
    return %c0_i32, %c0_i32_0 : i32, i32
  }
  func.func @transform_3(%arg0: i32, %arg1: memref<1xi32, #tpu.memory_space<smem>>) -> (i32, i32) {
    %c0_i32 = arith.constant 0 : i32
    %c0_i32_0 = arith.constant 0 : i32
    %c0_i32_1 = arith.constant 0 : i32
    return %c0_i32, %c0_i32_0 : i32, i32
  }
  func.func @transform_4(%arg0: i32, %arg1: memref<1xi32, #tpu.memory_space<smem>>) -> (i32, i32) {
    %c0_i32 = arith.constant 0 : i32
    %c0_i32_0 = arith.constant 0 : i32
    %c0_i32_1 = arith.constant 0 : i32
    return %c0_i32, %c0_i32_0 : i32, i32
  }
  func.func @transform_5(%arg0: i32, %arg1: memref<1xi32, #tpu.memory_space<smem>>) -> (i32, i32) {
    %c0_i32 = arith.constant 0 : i32
    %c0_i32_0 = arith.constant 0 : i32
    %c0_i32_1 = arith.constant 0 : i32
    return %c0_i32, %c0_i32_0 : i32, i32
  }
  func.func @transform_6(%arg0: i32, %arg1: memref<1xi32, #tpu.memory_space<smem>>) -> (i32, i32) {
    %c0_i32 = arith.constant 0 : i32
    %c0_i32_0 = arith.constant 0 : i32
    %c0_i32_1 = arith.constant 0 : i32
    return %c0_i32, %c0_i32_0 : i32, i32
  }
  func.func @transform_7(%arg0: i32, %arg1: memref<1xi32, #tpu.memory_space<smem>>) -> (i32, i32) {
    %c0_i32 = arith.constant 0 : i32
    %c0_i32_0 = arith.constant 0 : i32
    return %arg0, %c0_i32 : i32, i32
  }
}

</mosaic_0001>

<llo_original>
// kernel: net_forward.1
$region0: #{net_forward.1}
  #allocation0 [shape = 'u32[]', space=smem, size = 0x4, offset = 0x4, fixed_abs, tag = 'smem constant byte address 0x4 - core index']
  #allocation1 [shape = 'u32[72,128]{1,0:T(1,128)}', space=vmem, size = 0x9000, scoped, tag = 'internal scratch']
  #allocation2 [shape = 's32[1]{0}', space=sflag, size = 0x4, scoped, tag = 'scoped memory for net_forward.1']
  #allocation3 [shape = 's32[1]{0:T(128)S(6)}', space=smem, size = 0x200, scoped, tag = 'prefetched SMEM operand 0']
  %s0 = inlined_call_operand.<no memory space> [shape: s32[1], index: 0, kind: input, shape index: {}]
  %s1 = inlined_call_operand.vmem [shape: bf16[8,1536], index: 1, kind: input, shape index: {}]
  %s2 = inlined_call_operand.hbm [shape: bf16[1536,256], index: 2, kind: input, shape index: {}]
  %s3 = inlined_call_operand.vmem [shape: f32[1,256], index: 3, kind: input, shape index: {}]
  %s4 = inlined_call_operand.hbm [shape: bf16[256,128], index: 4, kind: input, shape index: {}]
  %s5 = inlined_call_operand.vmem [shape: f32[1,128], index: 5, kind: input, shape index: {}]
  %s6 = inlined_call_operand.vmem [shape: bf16[128,128], index: 6, kind: input, shape index: {}]
  %s7 = inlined_call_operand.vmem [shape: f32[1,128], index: 7, kind: input, shape index: {}]
  %s8 = inlined_call_operand.vmem [shape: f32[8,128], index: 8, kind: output, shape index: {}]
  %s9 = sld [smem:[#allocation0]]
  $region46: #{net_forward.1} parent=0
    _
  %s11 = ssub.s32 1, %s9
  %s12 = scalar_select 0, %s11, %s9
  %13 = sst [smem:[#allocation3]] %s0
  $region1: #{net_forward.1} parent=0
    #allocation4 [shape = 'u8[786432]{0}', space=vmem, size = 0xc0000, scoped, tag = 'input window, operand 2, single buffered']
    #allocation5 [shape = 's32[1]{0}', space=sflag, size = 0x4, scoped, tag = 'scoped memory for net_forward.1']
    #allocation6 [shape = 'u8[65536]{0}', space=vmem, size = 0x10000, scoped, tag = 'input window, operand 4, single buffered']
    #allocation7 [shape = 's32[1]{0}', space=sflag, size = 0x4, scoped, tag = 'scoped memory for net_forward.1']
    %14 = vsyncpa [#allocation5], 0
    %15 = vsyncpa [#allocation7], 0
    // Predicated region
    $region2: #{net_forward.1} parent=1 // pred_check
      _
    $region3: #{net_forward.1} parent=1 // pred_check_branch
      %17 = sbr.rel (0) target = $region5
    $region4: #{net_forward.1} parent=1 // pred_region
      _
    $region5: #{net_forward.1} parent=1 // pred_fallthru
      _
    // Predicated region
    $region6: #{net_forward.1} parent=1 // pred_check
      _
    $region7: #{net_forward.1} parent=1 // pred_check_branch
      %19 = sbr.rel (0) target = $region9
    $region8: #{net_forward.1} parent=1 // pred_region
      %21 = vsyncadd [#allocation5], 0
      %s22 = sshll.u32 %s2, 4
      %s23 = int_to_ptr.hbm [resolvable:$true] %s22
      %s24 = sshll.u32 [#allocation4], 4
      %s25 = int_to_ptr.vmem [resolvable:$true] %s24
      %30 = dma.hbm_to_vmem [thread:$0]  %s23, 24576, %s25, [#allocation5], 128, 128, 8
    $region9: #{net_forward.1} parent=1 // pred_fallthru
      _
    // Predicated region
    $region10: #{net_forward.1} parent=1 // pred_check
      _
    $region11: #{net_forward.1} parent=1 // pred_check_branch
      %32 = sbr.rel (0) target = $region13
    $region12: #{net_forward.1} parent=1 // pred_region
      _
    $region13: #{net_forward.1} parent=1 // pred_fallthru
      _
    // Predicated region
    $region14: #{net_forward.1} parent=1 // pred_check
      _
    $region15: #{net_forward.1} parent=1 // pred_check_branch
      %34 = sbr.rel (0) target = $region17
    $region16: #{net_forward.1} parent=1 // pred_region
      %36 = vsyncadd [#allocation7], 0
      %s37 = sshll.u32 %s4, 4
      %s38 = int_to_ptr.hbm [resolvable:$true] %s37
      %s39 = sshll.u32 [#allocation6], 4
      %s40 = int_to_ptr.vmem [resolvable:$true] %s39
      %45 = dma.hbm_to_vmem [thread:$0]  %s38, 2048, %s40, [#allocation7], 64, 64, 4
    $region17: #{net_forward.1} parent=1 // pred_fallthru
      _
    // Predicated region
    $region18: #{net_forward.1} parent=1 // pred_check
      _
    $region19: #{net_forward.1} parent=1 // pred_check_branch
      %47 = sbr.rel (0) target = $region21
    $region20: #{net_forward.1} parent=1 // pred_region
      _
    $region21: #{net_forward.1} parent=1 // pred_fallthru
      _
    // Predicated region
    $region22: #{net_forward.1} parent=1 // pred_check
      _
    $region23: #{net_forward.1} parent=1 // pred_check_branch
      %49 = sbr.rel (0) target = $region25
    $region24: #{net_forward.1} parent=1 // pred_region
      _
    $region25: #{net_forward.1} parent=1 // pred_fallthru
      _
    // Predicated region
    $region26: #{net_forward.1} parent=1 // pred_check
      _
    $region27: #{net_forward.1} parent=1 // pred_check_branch
      %51 = sbr.rel (0) target = $region29
    $region28: #{net_forward.1} parent=1 // pred_region
      _
    $region29: #{net_forward.1} parent=1 // pred_fallthru
      _
    // Predicated region
    $region30: #{net_forward.1} parent=1 // pred_check
      _
    $region31: #{net_forward.1} parent=1 // pred_check_branch
      %53 = sbr.rel (0) target = $region33
    $region32: #{net_forward.1} parent=1 // pred_region
      %55 = dma.done [#allocation5], 24576
    $region33: #{net_forward.1} parent=1 // pred_fallthru
      _
    // Predicated region
    $region34: #{net_forward.1} parent=1 // pred_check
      _
    $region35: #{net_forward.1} parent=1 // pred_check_branch
      %57 = sbr.rel (0) target = $region37
    $region36: #{net_forward.1} parent=1 // pred_region
      %59 = dma.done [#allocation7], 2048
    $region37: #{net_forward.1} parent=1 // pred_fallthru
      _
    %v60 = vld [vmem:[%s1] sm:$0xff]
    %v61 = vld [vmem:[%s1 + $0x8] sm:$0xff]
    %v62 = vld [vmem:[%s1 + $0x10] sm:$0xff]
    %v63 = vld [vmem:[%s1 + $0x18] sm:$0xff]
    %v64 = vld [vmem:[%s1 + $0x20] sm:$0xff]
    %v65 = vld [vmem:[%s1 + $0x28] sm:$0xff]
    %v66 = vld [vmem:[#allocation4] sm:$0xff]
    %v67 = vld [vmem:[#allocation4 + $0x8] sm:$0xff]
    %v68 = vld [vmem:[#allocation4 + $0x10] sm:$0xff]
    %v69 = vld [vmem:[#allocation4 + $0x18] sm:$0xff]
    %v70 = vld [vmem:[#allocation4 + $0x20] sm:$0xff]
    %v71 = vld [vmem:[#allocation4 + $0x28] sm:$0xff]
    %v72 = vld [vmem:[#allocation4 + $0x30] sm:$0xff]
    %v73 = vld [vmem:[#allocation4 + $0x38] sm:$0xff]
    %v74 = vld [vmem:[#allocation4 + $0x40] sm:$0xff]
    %v75 = vld [vmem:[#allocation4 + $0x48] sm:$0xff]
    %v76 = vld [vmem:[#allocation4 + $0x50] sm:$0xff]
    %v77 = vld [vmem:[#allocation4 + $0x58] sm:$0xff]
    %v78 = vld [vmem:[#allocation4 + $0x60] sm:$0xff]
    %v79 = vld [vmem:[#allocation4 + $0x68] sm:$0xff]
    %v80 = vld [vmem:[#allocation4 + $0x70] sm:$0xff]
    %v81 = vld [vmem:[#allocation4 + $0x78] sm:$0xff]
    %v82 = vld [vmem:[#allocation4 + $0x80] sm:$0xff]
    %v83 = vld [vmem:[#allocation4 + $0x88] sm:$0xff]
    %v84 = vld [vmem:[#allocation4 + $0x90] sm:$0xff]
    %v85 = vld [vmem:[#allocation4 + $0x98] sm:$0xff]
    %v86 = vld [vmem:[#allocation4 + $0xa0] sm:$0xff]
    %v87 = vld [vmem:[#allocation4 + $0xa8] sm:$0xff]
    %v88 = vld [vmem:[#allocation4 + $0xb0] sm:$0xff]
    %v89 = vld [vmem:[#allocation4 + $0xb8] sm:$0xff]
    %v90 = vld [vmem:[#allocation4 + $0xc0] sm:$0xff]
    %v91 = vld [vmem:[#allocation4 + $0xc8] sm:$0xff]
    %v92 = vld [vmem:[#allocation4 + $0xd0] sm:$0xff]
    %v93 = vld [vmem:[#allocation4 + $0xd8] sm:$0xff]
    %v94 = vld [vmem:[#allocation4 + $0xe0] sm:$0xff]
    %v95 = vld [vmem:[#allocation4 + $0xe8] sm:$0xff]
    %v96 = vld [vmem:[#allocation4 + $0xf0] sm:$0xff]
    %v97 = vld [vmem:[#allocation4 + $0xf8] sm:$0xff]
    %v98 = vld [vmem:[#allocation4 + $0x100] sm:$0xff]
    %v99 = vld [vmem:[#allocation4 + $0x108] sm:$0xff]
    %v100 = vld [vmem:[#allocation4 + $0x110] sm:$0xff]
    %v101 = vld [vmem:[#allocation4 + $0x118] sm:$0xff]
    %v102 = vld [vmem:[#allocation4 + $0x120] sm:$0xff]
    %v103 = vld [vmem:[#allocation4 + $0x128] sm:$0xff]
    %v104 = vld [vmem:[#allocation4 + $0x130] sm:$0xff]
    %v105 = vld [vmem:[#allocation4 + $0x138] sm:$0xff]
    %v106 = vld [vmem:[#allocation4 + $0x140] sm:$0xff]
    %v107 = vld [vmem:[#allocation4 + $0x148] sm:$0xff]
    %v108 = vld [vmem:[#allocation4 + $0x150] sm:$0xff]
    %v109 = vld [vmem:[#allocation4 + $0x158] sm:$0xff]
    %v110 = vld [vmem:[#allocation4 + $0x160] sm:$0xff]
    %v111 = vld [vmem:[#allocation4 + $0x168] sm:$0xff]
    %v112 = vld [vmem:[#allocation4 + $0x170] sm:$0xff]
    %v113 = vld [vmem:[#allocation4 + $0x178] sm:$0xff]
    %v114 = vld [vmem:[#allocation4 + $0x180] sm:$0xff]
    %v115 = vld [vmem:[#allocation4 + $0x188] sm:$0xff]
    %v116 = vld [vmem:[#allocation4 + $0x190] sm:$0xff]
    %v117 = vld [vmem:[#allocation4 + $0x198] sm:$0xff]
    %v118 = vld [vmem:[#allocation4 + $0x1a0] sm:$0xff]
    %v119 = vld [vmem:[#allocation4 + $0x1a8] sm:$0xff]
    %v120 = vld [vmem:[#allocation4 + $0x1b0] sm:$0xff]
    %v121 = vld [vmem:[#allocation4 + $0x1b8] sm:$0xff]
    %v122 = vld [vmem:[#allocation4 + $0x1c0] sm:$0xff]
    %v123 = vld [vmem:[#allocation4 + $0x1c8] sm:$0xff]
    %v124 = vld [vmem:[#allocation4 + $0x1d0] sm:$0xff]
    %v125 = vld [vmem:[#allocation4 + $0x1d8] sm:$0xff]
    %v126 = vld [vmem:[#allocation4 + $0x1e0] sm:$0xff]
    %v127 = vld [vmem:[#allocation4 + $0x1e8] sm:$0xff]
    %v128 = vld [vmem:[#allocation4 + $0x1f0] sm:$0xff]
    %v129 = vld [vmem:[#allocation4 + $0x1f8] sm:$0xff]
    %v130 = vld [vmem:[#allocation4 + $0x200] sm:$0xff]
    %v131 = vld [vmem:[#allocation4 + $0x208] sm:$0xff]
    %v132 = vld [vmem:[#allocation4 + $0x210] sm:$0xff]
    %v133 = vld [vmem:[#allocation4 + $0x218] sm:$0xff]
    %v134 = vld [vmem:[#allocation4 + $0x220] sm:$0xff]
    %v135 = vld [vmem:[#allocation4 + $0x228] sm:$0xff]
    %v136 = vld [vmem:[#allocation4 + $0x230] sm:$0xff]
    %v137 = vld [vmem:[#allocation4 + $0x238] sm:$0xff]
    %v138 = vld [vmem:[#allocation4 + $0x240] sm:$0xff]
    %v139 = vld [vmem:[#allocation4 + $0x248] sm:$0xff]
    %v140 = vld [vmem:[#allocation4 + $0x250] sm:$0xff]
    %v141 = vld [vmem:[#allocation4 + $0x258] sm:$0xff]
    %v142 = vld [vmem:[#allocation4 + $0x260] sm:$0xff]
    %v143 = vld [vmem:[#allocation4 + $0x268] sm:$0xff]
    %v144 = vld [vmem:[#allocation4 + $0x270] sm:$0xff]
    %v145 = vld [vmem:[#allocation4 + $0x278] sm:$0xff]
    %v146 = vld [vmem:[#allocation4 + $0x280] sm:$0xff]
    %v147 = vld [vmem:[#allocation4 + $0x288] sm:$0xff]
    %v148 = vld [vmem:[#allocation4 + $0x290] sm:$0xff]
    %v149 = vld [vmem:[#allocation4 + $0x298] sm:$0xff]
    %v150 = vld [vmem:[#allocation4 + $0x2a0] sm:$0xff]
    %v151 = vld [vmem:[#allocation4 + $0x2a8] sm:$0xff]
    %v152 = vld [vmem:[#allocation4 + $0x2b0] sm:$0xff]
    %v153 = vld [vmem:[#allocation4 + $0x2b8] sm:$0xff]
    %v154 = vld [vmem:[#allocation4 + $0x2c0] sm:$0xff]
    %v155 = vld [vmem:[#allocation4 + $0x2c8] sm:$0xff]
    %v156 = vld [vmem:[#allocation4 + $0x2d0] sm:$0xff]
    %v157 = vld [vmem:[#allocation4 + $0x2d8] sm:$0xff]
    %v158 = vld [vmem:[#allocation4 + $0x2e0] sm:$0xff]
    %v159 = vld [vmem:[#allocation4 + $0x2e8] sm:$0xff]
    %v160 = vld [vmem:[#allocation4 + $0x2f0] sm:$0xff]
    %v161 = vld [vmem:[#allocation4 + $0x2f8] sm:$0xff]
    %v162 = vld [vmem:[#allocation4 + $0x300] sm:$0xff]
    %v163 = vld [vmem:[#allocation4 + $0x308] sm:$0xff]
    %v164 = vld [vmem:[#allocation4 + $0x310] sm:$0xff]
    %v165 = vld [vmem:[#allocation4 + $0x318] sm:$0xff]
    %v166 = vld [vmem:[#allocation4 + $0x320] sm:$0xff]
    %v167 = vld [vmem:[#allocation4 + $0x328] sm:$0xff]
    %v168 = vld [vmem:[#allocation4 + $0x330] sm:$0xff]
    %v169 = vld [vmem:[#allocation4 + $0x338] sm:$0xff]
    %v170 = vld [vmem:[#allocation4 + $0x340] sm:$0xff]
    %v171 = vld [vmem:[#allocation4 + $0x348] sm:$0xff]
    %v172 = vld [vmem:[#allocation4 + $0x350] sm:$0xff]
    %v173 = vld [vmem:[#allocation4 + $0x358] sm:$0xff]
    %v174 = vld [vmem:[#allocation4 + $0x360] sm:$0xff]
    %v175 = vld [vmem:[#allocation4 + $0x368] sm:$0xff]
    %v176 = vld [vmem:[#allocation4 + $0x370] sm:$0xff]
    %v177 = vld [vmem:[#allocation4 + $0x378] sm:$0xff]
    %v178 = vld [vmem:[#allocation4 + $0x380] sm:$0xff]
    %v179 = vld [vmem:[#allocation4 + $0x388] sm:$0xff]
    %v180 = vld [vmem:[#allocation4 + $0x390] sm:$0xff]
    %v181 = vld [vmem:[#allocation4 + $0x398] sm:$0xff]
    %v182 = vld [vmem:[#allocation4 + $0x3a0] sm:$0xff]
    %v183 = vld [vmem:[#allocation4 + $0x3a8] sm:$0xff]
    %v184 = vld [vmem:[#allocation4 + $0x3b0] sm:$0xff]
    %v185 = vld [vmem:[#allocation4 + $0x3b8] sm:$0xff]
    %v186 = vld [vmem:[#allocation4 + $0x3c0] sm:$0xff]
    %v187 = vld [vmem:[#allocation4 + $0x3c8] sm:$0xff]
    %v188 = vld [vmem:[#allocation4 + $0x3d0] sm:$0xff]
    %v189 = vld [vmem:[#allocation4 + $0x3d8] sm:$0xff]
    %v190 = vld [vmem:[#allocation4 + $0x3e0] sm:$0xff]
    %v191 = vld [vmem:[#allocation4 + $0x3e8] sm:$0xff]
    %v192 = vld [vmem:[#allocation4 + $0x3f0] sm:$0xff]
    %v193 = vld [vmem:[#allocation4 + $0x3f8] sm:$0xff]
    %v194 = vld [vmem:[#allocation4 + $0x400] sm:$0xff]
    %v195 = vld [vmem:[#allocation4 + $0x408] sm:$0xff]
    %v196 = vld [vmem:[#allocation4 + $0x410] sm:$0xff]
    %v197 = vld [vmem:[#allocation4 + $0x418] sm:$0xff]
    %v198 = vld [vmem:[#allocation4 + $0x420] sm:$0xff]
    %v199 = vld [vmem:[#allocation4 + $0x428] sm:$0xff]
    %v200 = vld [vmem:[#allocation4 + $0x430] sm:$0xff]
    %v201 = vld [vmem:[#allocation4 + $0x438] sm:$0xff]
    %v202 = vld [vmem:[#allocation4 + $0x440] sm:$0xff]
    %v203 = vld [vmem:[#allocation4 + $0x448] sm:$0xff]
    %v204 = vld [vmem:[#allocation4 + $0x450] sm:$0xff]
    %v205 = vld [vmem:[#allocation4 + $0x458] sm:$0xff]
    %v206 = vld [vmem:[#allocation4 + $0x460] sm:$0xff]
    %v207 = vld [vmem:[#allocation4 + $0x468] sm:$0xff]
    %v208 = vld [vmem:[#allocation4 + $0x470] sm:$0xff]
    %v209 = vld [vmem:[#allocation4 + $0x478] sm:$0xff]
    %v210 = vld [vmem:[#allocation4 + $0x480] sm:$0xff]
    %v211 = vld [vmem:[#allocation4 + $0x488] sm:$0xff]
    %v212 = vld [vmem:[#allocation4 + $0x490] sm:$0xff]
    %v213 = vld [vmem:[#allocation4 + $0x498] sm:$0xff]
    %v214 = vld [vmem:[#allocation4 + $0x4a0] sm:$0xff]
    %v215 = vld [vmem:[#allocation4 + $0x4a8] sm:$0xff]
    %v216 = vld [vmem:[#allocation4 + $0x4b0] sm:$0xff]
    %v217 = vld [vmem:[#allocation4 + $0x4b8] sm:$0xff]
    %v218 = vld [vmem:[#allocation4 + $0x4c0] sm:$0xff]
    %v219 = vld [vmem:[#allocation4 + $0x4c8] sm:$0xff]
    %v220 = vld [vmem:[#allocation4 + $0x4d0] sm:$0xff]
    %v221 = vld [vmem:[#allocation4 + $0x4d8] sm:$0xff]
    %v222 = vld [vmem:[#allocation4 + $0x4e0] sm:$0xff]
    %v223 = vld [vmem:[#allocation4 + $0x4e8] sm:$0xff]
    %v224 = vld [vmem:[#allocation4 + $0x4f0] sm:$0xff]
    %v225 = vld [vmem:[#allocation4 + $0x4f8] sm:$0xff]
    %v226 = vld [vmem:[#allocation4 + $0x500] sm:$0xff]
    %v227 = vld [vmem:[#allocation4 + $0x508] sm:$0xff]
    %v228 = vld [vmem:[#allocation4 + $0x510] sm:$0xff]
    %v229 = vld [vmem:[#allocation4 + $0x518] sm:$0xff]
    %v230 = vld [vmem:[#allocation4 + $0x520] sm:$0xff]
    %v231 = vld [vmem:[#allocation4 + $0x528] sm:$0xff]
    %v232 = vld [vmem:[#allocation4 + $0x530] sm:$0xff]
    %v233 = vld [vmem:[#allocation4 + $0x538] sm:$0xff]
    %v234 = vld [vmem:[#allocation4 + $0x540] sm:$0xff]
    %v235 = vld [vmem:[#allocation4 + $0x548] sm:$0xff]
    %v236 = vld [vmem:[#allocation4 + $0x550] sm:$0xff]
    %v237 = vld [vmem:[#allocation4 + $0x558] sm:$0xff]
    %v238 = vld [vmem:[#allocation4 + $0x560] sm:$0xff]
    %v239 = vld [vmem:[#allocation4 + $0x568] sm:$0xff]
    %v240 = vld [vmem:[#allocation4 + $0x570] sm:$0xff]
    %v241 = vld [vmem:[#allocation4 + $0x578] sm:$0xff]
    %v242 = vld [vmem:[#allocation4 + $0x580] sm:$0xff]
    %v243 = vld [vmem:[#allocation4 + $0x588] sm:$0xff]
    %v244 = vld [vmem:[#allocation4 + $0x590] sm:$0xff]
    %v245 = vld [vmem:[#allocation4 + $0x598] sm:$0xff]
    %v246 = vld [vmem:[#allocation4 + $0x5a0] sm:$0xff]
    %v247 = vld [vmem:[#allocation4 + $0x5a8] sm:$0xff]
    %v248 = vld [vmem:[#allocation4 + $0x5b0] sm:$0xff]
    %v249 = vld [vmem:[#allocation4 + $0x5b8] sm:$0xff]
    %v250 = vld [vmem:[#allocation4 + $0x5c0] sm:$0xff]
    %v251 = vld [vmem:[#allocation4 + $0x5c8] sm:$0xff]
    %v252 = vld [vmem:[#allocation4 + $0x5d0] sm:$0xff]
    %v253 = vld [vmem:[#allocation4 + $0x5d8] sm:$0xff]
    %v254 = vld [vmem:[#allocation4 + $0x5e0] sm:$0xff]
    %v255 = vld [vmem:[#allocation4 + $0x5e8] sm:$0xff]
    %v256 = vld [vmem:[#allocation4 + $0x5f0] sm:$0xff]
    %v257 = vld [vmem:[#allocation4 + $0x5f8] sm:$0xff]
    %v258 = vld [vmem:[%s3] sm:$0x3]
    %v260 = vperm.slane %v258, 0
    %v261 = vperm.slane %v258, 1
    %v270 = vunpack.c.l.b16 %v60
    %v271 = vunpack.c.h.b16 %v60
    %v272 = vunpack.c.l.b16 %v61
    %v273 = vunpack.c.h.b16 %v61
    %v274 = vunpack.c.l.b16 %v62
    %v275 = vunpack.c.h.b16 %v62
    %v276 = vunpack.c.l.b16 %v63
    %v277 = vunpack.c.h.b16 %v63
    %v278 = vunpack.c.l.b16 %v64
    %v279 = vunpack.c.h.b16 %v64
    %v280 = vunpack.c.l.b16 %v65
    %v281 = vunpack.c.h.b16 %v65
    %v282 = vpack.c.b16 %v270, %v270
    %v283 = vpack.c.b16 %v271, %v271
    %v284 = vpack.c.b16 %v272, %v272
    %v285 = vpack.c.b16 %v273, %v273
    %v286 = vpack.c.b16 %v274, %v274
    %v287 = vpack.c.b16 %v275, %v275
    %v288 = vpack.c.b16 %v276, %v276
    %v289 = vpack.c.b16 %v277, %v277
    %v290 = vpack.c.b16 %v278, %v278
    %v291 = vpack.c.b16 %v279, %v279
    %v292 = vpack.c.b16 %v280, %v280
    %v293 = vpack.c.b16 %v281, %v281
    %v498 = vunpack.c.l.b16 %v66
    %v499 = vunpack.c.h.b16 %v66
    %v500 = vunpack.c.l.b16 %v67
    %v501 = vunpack.c.h.b16 %v67
    %v502 = vunpack.c.l.b16 %v68
    %v503 = vunpack.c.h.b16 %v68
    %v504 = vunpack.c.l.b16 %v69
    %v505 = vunpack.c.h.b16 %v69
    %v506 = vunpack.c.l.b16 %v70
    %v507 = vunpack.c.h.b16 %v70
    %v508 = vunpack.c.l.b16 %v71
    %v509 = vunpack.c.h.b16 %v71
    %v510 = vunpack.c.l.b16 %v72
    %v511 = vunpack.c.h.b16 %v72
    %v512 = vunpack.c.l.b16 %v73
    %v513 = vunpack.c.h.b16 %v73
    %v514 = vunpack.c.l.b16 %v74
    %v515 = vunpack.c.h.b16 %v74
    %v516 = vunpack.c.l.b16 %v75
    %v517 = vunpack.c.h.b16 %v75
    %v518 = vunpack.c.l.b16 %v76
    %v519 = vunpack.c.h.b16 %v76
    %v520 = vunpack.c.l.b16 %v77
    %v521 = vunpack.c.h.b16 %v77
    %v522 = vunpack.c.l.b16 %v78
    %v523 = vunpack.c.h.b16 %v78
    %v524 = vunpack.c.l.b16 %v79
    %v525 = vunpack.c.h.b16 %v79
    %v526 = vunpack.c.l.b16 %v80
    %v527 = vunpack.c.h.b16 %v80
    %v528 = vunpack.c.l.b16 %v81
    %v529 = vunpack.c.h.b16 %v81
    %v530 = vunpack.c.l.b16 %v82
    %v531 = vunpack.c.h.b16 %v82
    %v532 = vunpack.c.l.b16 %v83
    %v533 = vunpack.c.h.b16 %v83
    %v534 = vunpack.c.l.b16 %v84
    %v535 = vunpack.c.h.b16 %v84
    %v536 = vunpack.c.l.b16 %v85
    %v537 = vunpack.c.h.b16 %v85
    %v538 = vunpack.c.l.b16 %v86
    %v539 = vunpack.c.h.b16 %v86
    %v540 = vunpack.c.l.b16 %v87
    %v541 = vunpack.c.h.b16 %v87
    %v542 = vunpack.c.l.b16 %v88
    %v543 = vunpack.c.h.b16 %v88
    %v544 = vunpack.c.l.b16 %v89
    %v545 = vunpack.c.h.b16 %v89
    %v546 = vunpack.c.l.b16 %v90
    %v547 = vunpack.c.h.b16 %v90
    %v548 = vunpack.c.l.b16 %v91
    %v549 = vunpack.c.h.b16 %v91
    %v550 = vunpack.c.l.b16 %v92
    %v551 = vunpack.c.h.b16 %v92
    %v552 = vunpack.c.l.b16 %v93
    %v553 = vunpack.c.h.b16 %v93
    %v554 = vunpack.c.l.b16 %v94
    %v555 = vunpack.c.h.b16 %v94
    %v556 = vunpack.c.l.b16 %v95
    %v557 = vunpack.c.h.b16 %v95
    %v558 = vunpack.c.l.b16 %v96
    %v559 = vunpack.c.h.b16 %v96
    %v560 = vunpack.c.l.b16 %v97
    %v561 = vunpack.c.h.b16 %v97
    %v562 = vunpack.c.l.b16 %v98
    %v563 = vunpack.c.h.b16 %v98
    %v564 = vunpack.c.l.b16 %v99
    %v565 = vunpack.c.h.b16 %v99
    %v566 = vunpack.c.l.b16 %v100
    %v567 = vunpack.c.h.b16 %v100
    %v568 = vunpack.c.l.b16 %v101
    %v569 = vunpack.c.h.b16 %v101
    %v570 = vunpack.c.l.b16 %v102
    %v571 = vunpack.c.h.b16 %v102
    %v572 = vunpack.c.l.b16 %v103
    %v573 = vunpack.c.h.b16 %v103
    %v574 = vunpack.c.l.b16 %v104
    %v575 = vunpack.c.h.b16 %v104
    %v576 = vunpack.c.l.b16 %v105
    %v577 = vunpack.c.h.b16 %v105
    %v578 = vunpack.c.l.b16 %v106
    %v579 = vunpack.c.h.b16 %v106
    %v580 = vunpack.c.l.b16 %v107
    %v581 = vunpack.c.h.b16 %v107
    %v582 = vunpack.c.l.b16 %v108
    %v583 = vunpack.c.h.b16 %v108
    %v584 = vunpack.c.l.b16 %v109
    %v585 = vunpack.c.h.b16 %v109
    %v586 = vunpack.c.l.b16 %v110
    %v587 = vunpack.c.h.b16 %v110
    %v588 = vunpack.c.l.b16 %v111
    %v589 = vunpack.c.h.b16 %v111
    %v590 = vunpack.c.l.b16 %v112
    %v591 = vunpack.c.h.b16 %v112
    %v592 = vunpack.c.l.b16 %v113
    %v593 = vunpack.c.h.b16 %v113
    %v594 = vunpack.c.l.b16 %v114
    %v595 = vunpack.c.h.b16 %v114
    %v596 = vunpack.c.l.b16 %v115
    %v597 = vunpack.c.h.b16 %v115
    %v598 = vunpack.c.l.b16 %v116
    %v599 = vunpack.c.h.b16 %v116
    %v600 = vunpack.c.l.b16 %v117
    %v601 = vunpack.c.h.b16 %v117
    %v602 = vunpack.c.l.b16 %v118
    %v603 = vunpack.c.h.b16 %v118
    %v604 = vunpack.c.l.b16 %v119
    %v605 = vunpack.c.h.b16 %v119
    %v606 = vunpack.c.l.b16 %v120
    %v607 = vunpack.c.h.b16 %v120
    %v608 = vunpack.c.l.b16 %v121
    %v609 = vunpack.c.h.b16 %v121
    %v610 = vunpack.c.l.b16 %v122
    %v611 = vunpack.c.h.b16 %v122
    %v612 = vunpack.c.l.b16 %v123
    %v613 = vunpack.c.h.b16 %v123
    %v614 = vunpack.c.l.b16 %v124
    %v615 = vunpack.c.h.b16 %v124
    %v616 = vunpack.c.l.b16 %v125
    %v617 = vunpack.c.h.b16 %v125
    %v618 = vunpack.c.l.b16 %v126
    %v619 = vunpack.c.h.b16 %v126
    %v620 = vunpack.c.l.b16 %v127
    %v621 = vunpack.c.h.b16 %v127
    %v622 = vunpack.c.l.b16 %v128
    %v623 = vunpack.c.h.b16 %v128
    %v624 = vunpack.c.l.b16 %v129
    %v625 = vunpack.c.h.b16 %v129
    %v626 = vunpack.c.l.b16 %v130
    %v627 = vunpack.c.h.b16 %v130
    %v628 = vunpack.c.l.b16 %v131
    %v629 = vunpack.c.h.b16 %v131
    %v630 = vunpack.c.l.b16 %v132
    %v631 = vunpack.c.h.b16 %v132
    %v632 = vunpack.c.l.b16 %v133
    %v633 = vunpack.c.h.b16 %v133
    %v634 = vunpack.c.l.b16 %v134
    %v635 = vunpack.c.h.b16 %v134
    %v636 = vunpack.c.l.b16 %v135
    %v637 = vunpack.c.h.b16 %v135
    %v638 = vunpack.c.l.b16 %v136
    %v639 = vunpack.c.h.b16 %v136
    %v640 = vunpack.c.l.b16 %v137
    %v641 = vunpack.c.h.b16 %v137
    %v642 = vunpack.c.l.b16 %v138
    %v643 = vunpack.c.h.b16 %v138
    %v644 = vunpack.c.l.b16 %v139
    %v645 = vunpack.c.h.b16 %v139
    %v646 = vunpack.c.l.b16 %v140
    %v647 = vunpack.c.h.b16 %v140
    %v648 = vunpack.c.l.b16 %v141
    %v649 = vunpack.c.h.b16 %v141
    %v650 = vunpack.c.l.b16 %v142
    %v651 = vunpack.c.h.b16 %v142
    %v652 = vunpack.c.l.b16 %v143
    %v653 = vunpack.c.h.b16 %v143
    %v654 = vunpack.c.l.b16 %v144
    %v655 = vunpack.c.h.b16 %v144
    %v656 = vunpack.c.l.b16 %v145
    %v657 = vunpack.c.h.b16 %v145
    %v658 = vunpack.c.l.b16 %v146
    %v659 = vunpack.c.h.b16 %v146
    %v660 = vunpack.c.l.b16 %v147
    %v661 = vunpack.c.h.b16 %v147
    %v662 = vunpack.c.l.b16 %v148
    %v663 = vunpack.c.h.b16 %v148
    %v664 = vunpack.c.l.b16 %v149
    %v665 = vunpack.c.h.b16 %v149
    %v666 = vunpack.c.l.b16 %v150
    %v667 = vunpack.c.h.b16 %v150
    %v668 = vunpack.c.l.b16 %v151
    %v669 = vunpack.c.h.b16 %v151
    %v670 = vunpack.c.l.b16 %v152
    %v671 = vunpack.c.h.b16 %v152
    %v672 = vunpack.c.l.b16 %v153
    %v673 = vunpack.c.h.b16 %v153
    %v674 = vunpack.c.l.b16 %v154
    %v675 = vunpack.c.h.b16 %v154
    %v676 = vunpack.c.l.b16 %v155
    %v677 = vunpack.c.h.b16 %v155
    %v678 = vunpack.c.l.b16 %v156
    %v679 = vunpack.c.h.b16 %v156
    %v680 = vunpack.c.l.b16 %v157
    %v681 = vunpack.c.h.b16 %v157
    %v682 = vunpack.c.l.b16 %v158
    %v683 = vunpack.c.h.b16 %v158
    %v684 = vunpack.c.l.b16 %v159
    %v685 = vunpack.c.h.b16 %v159
    %v686 = vunpack.c.l.b16 %v160
    %v687 = vunpack.c.h.b16 %v160
    %v688 = vunpack.c.l.b16 %v161
    %v689 = vunpack.c.h.b16 %v161
    %v690 = vunpack.c.l.b16 %v162
    %v691 = vunpack.c.h.b16 %v162
    %v692 = vunpack.c.l.b16 %v163
    %v693 = vunpack.c.h.b16 %v163
    %v694 = vunpack.c.l.b16 %v164
    %v695 = vunpack.c.h.b16 %v164
    %v696 = vunpack.c.l.b16 %v165
    %v697 = vunpack.c.h.b16 %v165
    %v698 = vunpack.c.l.b16 %v166
    %v699 = vunpack.c.h.b16 %v166
    %v700 = vunpack.c.l.b16 %v167
    %v701 = vunpack.c.h.b16 %v167
    %v702 = vunpack.c.l.b16 %v168
    %v703 = vunpack.c.h.b16 %v168
    %v704 = vunpack.c.l.b16 %v169
    %v705 = vunpack.c.h.b16 %v169
    %v706 = vunpack.c.l.b16 %v170
    %v707 = vunpack.c.h.b16 %v170
    %v708 = vunpack.c.l.b16 %v171
    %v709 = vunpack.c.h.b16 %v171
    %v710 = vunpack.c.l.b16 %v172
    %v711 = vunpack.c.h.b16 %v172
    %v712 = vunpack.c.l.b16 %v173
    %v713 = vunpack.c.h.b16 %v173
    %v714 = vunpack.c.l.b16 %v174
    %v715 = vunpack.c.h.b16 %v174
    %v716 = vunpack.c.l.b16 %v175
    %v717 = vunpack.c.h.b16 %v175
    %v718 = vunpack.c.l.b16 %v176
    %v719 = vunpack.c.h.b16 %v176
    %v720 = vunpack.c.l.b16 %v177
    %v721 = vunpack.c.h.b16 %v177
    %v722 = vunpack.c.l.b16 %v178
    %v723 = vunpack.c.h.b16 %v178
    %v724 = vunpack.c.l.b16 %v179
    %v725 = vunpack.c.h.b16 %v179
    %v726 = vunpack.c.l.b16 %v180
    %v727 = vunpack.c.h.b16 %v180
    %v728 = vunpack.c.l.b16 %v181
    %v729 = vunpack.c.h.b16 %v181
    %v730 = vunpack.c.l.b16 %v182
    %v731 = vunpack.c.h.b16 %v182
    %v732 = vunpack.c.l.b16 %v183
    %v733 = vunpack.c.h.b16 %v183
    %v734 = vunpack.c.l.b16 %v184
    %v735 = vunpack.c.h.b16 %v184
    %v736 = vunpack.c.l.b16 %v185
    %v737 = vunpack.c.h.b16 %v185
    %v738 = vunpack.c.l.b16 %v186
    %v739 = vunpack.c.h.b16 %v186
    %v740 = vunpack.c.l.b16 %v187
    %v741 = vunpack.c.h.b16 %v187
    %v742 = vunpack.c.l.b16 %v188
    %v743 = vunpack.c.h.b16 %v188
    %v744 = vunpack.c.l.b16 %v189
    %v745 = vunpack.c.h.b16 %v189
    %v746 = vunpack.c.l.b16 %v190
    %v747 = vunpack.c.h.b16 %v190
    %v748 = vunpack.c.l.b16 %v191
    %v749 = vunpack.c.h.b16 %v191
    %v750 = vunpack.c.l.b16 %v192
    %v751 = vunpack.c.h.b16 %v192
    %v752 = vunpack.c.l.b16 %v193
    %v753 = vunpack.c.h.b16 %v193
    %v754 = vunpack.c.l.b16 %v194
    %v755 = vunpack.c.h.b16 %v194
    %v756 = vunpack.c.l.b16 %v195
    %v757 = vunpack.c.h.b16 %v195
    %v758 = vunpack.c.l.b16 %v196
    %v759 = vunpack.c.h.b16 %v196
    %v760 = vunpack.c.l.b16 %v197
    %v761 = vunpack.c.h.b16 %v197
    %v762 = vunpack.c.l.b16 %v198
    %v763 = vunpack.c.h.b16 %v198
    %v764 = vunpack.c.l.b16 %v199
    %v765 = vunpack.c.h.b16 %v199
    %v766 = vunpack.c.l.b16 %v200
    %v767 = vunpack.c.h.b16 %v200
    %v768 = vunpack.c.l.b16 %v201
    %v769 = vunpack.c.h.b16 %v201
    %v770 = vunpack.c.l.b16 %v202
    %v771 = vunpack.c.h.b16 %v202
    %v772 = vunpack.c.l.b16 %v203
    %v773 = vunpack.c.h.b16 %v203
    %v774 = vunpack.c.l.b16 %v204
    %v775 = vunpack.c.h.b16 %v204
    %v776 = vunpack.c.l.b16 %v205
    %v777 = vunpack.c.h.b16 %v205
    %v778 = vunpack.c.l.b16 %v206
    %v779 = vunpack.c.h.b16 %v206
    %v780 = vunpack.c.l.b16 %v207
    %v781 = vunpack.c.h.b16 %v207
    %v782 = vunpack.c.l.b16 %v208
    %v783 = vunpack.c.h.b16 %v208
    %v784 = vunpack.c.l.b16 %v209
    %v785 = vunpack.c.h.b16 %v209
    %v786 = vunpack.c.l.b16 %v210
    %v787 = vunpack.c.h.b16 %v210
    %v788 = vunpack.c.l.b16 %v211
    %v789 = vunpack.c.h.b16 %v211
    %v790 = vunpack.c.l.b16 %v212
    %v791 = vunpack.c.h.b16 %v212
    %v792 = vunpack.c.l.b16 %v213
    %v793 = vunpack.c.h.b16 %v213
    %v794 = vunpack.c.l.b16 %v214
    %v795 = vunpack.c.h.b16 %v214
    %v796 = vunpack.c.l.b16 %v215
    %v797 = vunpack.c.h.b16 %v215
    %v798 = vunpack.c.l.b16 %v216
    %v799 = vunpack.c.h.b16 %v216
    %v800 = vunpack.c.l.b16 %v217
    %v801 = vunpack.c.h.b16 %v217
    %v802 = vunpack.c.l.b16 %v218
    %v803 = vunpack.c.h.b16 %v218
    %v804 = vunpack.c.l.b16 %v219
    %v805 = vunpack.c.h.b16 %v219
    %v806 = vunpack.c.l.b16 %v220
    %v807 = vunpack.c.h.b16 %v220
    %v808 = vunpack.c.l.b16 %v221
    %v809 = vunpack.c.h.b16 %v221
    %v810 = vunpack.c.l.b16 %v222
    %v811 = vunpack.c.h.b16 %v222
    %v812 = vunpack.c.l.b16 %v223
    %v813 = vunpack.c.h.b16 %v223
    %v814 = vunpack.c.l.b16 %v224
    %v815 = vunpack.c.h.b16 %v224
    %v816 = vunpack.c.l.b16 %v225
    %v817 = vunpack.c.h.b16 %v225
    %v818 = vunpack.c.l.b16 %v226
    %v819 = vunpack.c.h.b16 %v226
    %v820 = vunpack.c.l.b16 %v227
    %v821 = vunpack.c.h.b16 %v227
    %v822 = vunpack.c.l.b16 %v228
    %v823 = vunpack.c.h.b16 %v228
    %v824 = vunpack.c.l.b16 %v229
    %v825 = vunpack.c.h.b16 %v229
    %v826 = vunpack.c.l.b16 %v230
    %v827 = vunpack.c.h.b16 %v230
    %v828 = vunpack.c.l.b16 %v231
    %v829 = vunpack.c.h.b16 %v231
    %v830 = vunpack.c.l.b16 %v232
    %v831 = vunpack.c.h.b16 %v232
    %v832 = vunpack.c.l.b16 %v233
    %v833 = vunpack.c.h.b16 %v233
    %v834 = vunpack.c.l.b16 %v234
    %v835 = vunpack.c.h.b16 %v234
    %v836 = vunpack.c.l.b16 %v235
    %v837 = vunpack.c.h.b16 %v235
    %v838 = vunpack.c.l.b16 %v236
    %v839 = vunpack.c.h.b16 %v236
    %v840 = vunpack.c.l.b16 %v237
    %v841 = vunpack.c.h.b16 %v237
    %v842 = vunpack.c.l.b16 %v238
    %v843 = vunpack.c.h.b16 %v238
    %v844 = vunpack.c.l.b16 %v239
    %v845 = vunpack.c.h.b16 %v239
    %v846 = vunpack.c.l.b16 %v240
    %v847 = vunpack.c.h.b16 %v240
    %v848 = vunpack.c.l.b16 %v241
    %v849 = vunpack.c.h.b16 %v241
    %v850 = vunpack.c.l.b16 %v242
    %v851 = vunpack.c.h.b16 %v242
    %v852 = vunpack.c.l.b16 %v243
    %v853 = vunpack.c.h.b16 %v243
    %v854 = vunpack.c.l.b16 %v244
    %v855 = vunpack.c.h.b16 %v244
    %v856 = vunpack.c.l.b16 %v245
    %v857 = vunpack.c.h.b16 %v245
    %v858 = vunpack.c.l.b16 %v246
    %v859 = vunpack.c.h.b16 %v246
    %v860 = vunpack.c.l.b16 %v247
    %v861 = vunpack.c.h.b16 %v247
    %v862 = vunpack.c.l.b16 %v248
    %v863 = vunpack.c.h.b16 %v248
    %v864 = vunpack.c.l.b16 %v249
    %v865 = vunpack.c.h.b16 %v249
    %v866 = vunpack.c.l.b16 %v250
    %v867 = vunpack.c.h.b16 %v250
    %v868 = vunpack.c.l.b16 %v251
    %v869 = vunpack.c.h.b16 %v251
    %v870 = vunpack.c.l.b16 %v252
    %v871 = vunpack.c.h.b16 %v252
    %v872 = vunpack.c.l.b16 %v253
    %v873 = vunpack.c.h.b16 %v253
    %v874 = vunpack.c.l.b16 %v254
    %v875 = vunpack.c.h.b16 %v254
    %v876 = vunpack.c.l.b16 %v255
    %v877 = vunpack.c.h.b16 %v255
    %v878 = vunpack.c.l.b16 %v256
    %v879 = vunpack.c.h.b16 %v256
    %v880 = vunpack.c.l.b16 %v257
    %v881 = vunpack.c.h.b16 %v257
    %v882 = vpack.c.b16 %v500, %v498
    %v883 = vpack.c.b16 %v501, %v499
    %v884 = vpack.c.b16 %v504, %v502
    %v885 = vpack.c.b16 %v505, %v503
    %v886 = vpack.c.b16 %v508, %v506
    %v887 = vpack.c.b16 %v509, %v507
    %v888 = vpack.c.b16 %v512, %v510
    %v889 = vpack.c.b16 %v513, %v511
    %v890 = vpack.c.b16 %v516, %v514
    %v891 = vpack.c.b16 %v517, %v515
    %v892 = vpack.c.b16 %v520, %v518
    %v893 = vpack.c.b16 %v521, %v519
    %v894 = vpack.c.b16 %v524, %v522
    %v895 = vpack.c.b16 %v525, %v523
    %v896 = vpack.c.b16 %v528, %v526
    %v897 = vpack.c.b16 %v529, %v527
    %v898 = vpack.c.b16 %v532, %v530
    %v899 = vpack.c.b16 %v533, %v531
    %v900 = vpack.c.b16 %v536, %v534
    %v901 = vpack.c.b16 %v537, %v535
    %v902 = vpack.c.b16 %v540, %v538
    %v903 = vpack.c.b16 %v541, %v539
    %v904 = vpack.c.b16 %v544, %v542
    %v905 = vpack.c.b16 %v545, %v543
    %v906 = vpack.c.b16 %v548, %v546
    %v907 = vpack.c.b16 %v549, %v547
    %v908 = vpack.c.b16 %v552, %v550
    %v909 = vpack.c.b16 %v553, %v551
    %v910 = vpack.c.b16 %v556, %v554
    %v911 = vpack.c.b16 %v557, %v555
    %v912 = vpack.c.b16 %v560, %v558
    %v913 = vpack.c.b16 %v561, %v559
    %v914 = vpack.c.b16 %v564, %v562
    %v915 = vpack.c.b16 %v565, %v563
    %v916 = vpack.c.b16 %v568, %v566
    %v917 = vpack.c.b16 %v569, %v567
    %v918 = vpack.c.b16 %v572, %v570
    %v919 = vpack.c.b16 %v573, %v571
    %v920 = vpack.c.b16 %v576, %v574
    %v921 = vpack.c.b16 %v577, %v575
    %v922 = vpack.c.b16 %v580, %v578
    %v923 = vpack.c.b16 %v581, %v579
    %v924 = vpack.c.b16 %v584, %v582
    %v925 = vpack.c.b16 %v585, %v583
    %v926 = vpack.c.b16 %v588, %v586
    %v927 = vpack.c.b16 %v589, %v587
    %v928 = vpack.c.b16 %v592, %v590
    %v929 = vpack.c.b16 %v593, %v591
    %v930 = vpack.c.b16 %v596, %v594
    %v931 = vpack.c.b16 %v597, %v595
    %v932 = vpack.c.b16 %v600, %v598
    %v933 = vpack.c.b16 %v601, %v599
    %v934 = vpack.c.b16 %v604, %v602
    %v935 = vpack.c.b16 %v605, %v603
    %v936 = vpack.c.b16 %v608, %v606
    %v937 = vpack.c.b16 %v609, %v607
    %v938 = vpack.c.b16 %v612, %v610
    %v939 = vpack.c.b16 %v613, %v611
    %v940 = vpack.c.b16 %v616, %v614
    %v941 = vpack.c.b16 %v617, %v615
    %v942 = vpack.c.b16 %v620, %v618
    %v943 = vpack.c.b16 %v621, %v619
    %v944 = vpack.c.b16 %v624, %v622
    %v945 = vpack.c.b16 %v625, %v623
    %v946 = vpack.c.b16 %v628, %v626
    %v947 = vpack.c.b16 %v629, %v627
    %v948 = vpack.c.b16 %v632, %v630
    %v949 = vpack.c.b16 %v633, %v631
    %v950 = vpack.c.b16 %v636, %v634
    %v951 = vpack.c.b16 %v637, %v635
    %v952 = vpack.c.b16 %v640, %v638
    %v953 = vpack.c.b16 %v641, %v639
    %v954 = vpack.c.b16 %v644, %v642
    %v955 = vpack.c.b16 %v645, %v643
    %v956 = vpack.c.b16 %v648, %v646
    %v957 = vpack.c.b16 %v649, %v647
    %v958 = vpack.c.b16 %v652, %v650
    %v959 = vpack.c.b16 %v653, %v651
    %v960 = vpack.c.b16 %v656, %v654
    %v961 = vpack.c.b16 %v657, %v655
    %v962 = vpack.c.b16 %v660, %v658
    %v963 = vpack.c.b16 %v661, %v659
    %v964 = vpack.c.b16 %v664, %v662
    %v965 = vpack.c.b16 %v665, %v663
    %v966 = vpack.c.b16 %v668, %v666
    %v967 = vpack.c.b16 %v669, %v667
    %v968 = vpack.c.b16 %v672, %v670
    %v969 = vpack.c.b16 %v673, %v671
    %v970 = vpack.c.b16 %v676, %v674
    %v971 = vpack.c.b16 %v677, %v675
    %v972 = vpack.c.b16 %v680, %v678
    %v973 = vpack.c.b16 %v681, %v679
    %v974 = vpack.c.b16 %v684, %v682
    %v975 = vpack.c.b16 %v685, %v683
    %v976 = vpack.c.b16 %v688, %v686
    %v977 = vpack.c.b16 %v689, %v687
    %v978 = vpack.c.b16 %v692, %v690
    %v979 = vpack.c.b16 %v693, %v691
    %v980 = vpack.c.b16 %v696, %v694
    %v981 = vpack.c.b16 %v697, %v695
    %v982 = vpack.c.b16 %v700, %v698
    %v983 = vpack.c.b16 %v701, %v699
    %v984 = vpack.c.b16 %v704, %v702
    %v985 = vpack.c.b16 %v705, %v703
    %v986 = vpack.c.b16 %v708, %v706
    %v987 = vpack.c.b16 %v709, %v707
    %v988 = vpack.c.b16 %v712, %v710
    %v989 = vpack.c.b16 %v713, %v711
    %v990 = vpack.c.b16 %v716, %v714
    %v991 = vpack.c.b16 %v717, %v715
    %v992 = vpack.c.b16 %v720, %v718
    %v993 = vpack.c.b16 %v721, %v719
    %v994 = vpack.c.b16 %v724, %v722
    %v995 = vpack.c.b16 %v725, %v723
    %v996 = vpack.c.b16 %v728, %v726
    %v997 = vpack.c.b16 %v729, %v727
    %v998 = vpack.c.b16 %v732, %v730
    %v999 = vpack.c.b16 %v733, %v731
    %v1000 = vpack.c.b16 %v736, %v734
    %v1001 = vpack.c.b16 %v737, %v735
    %v1002 = vpack.c.b16 %v740, %v738
    %v1003 = vpack.c.b16 %v741, %v739
    %v1004 = vpack.c.b16 %v744, %v742
    %v1005 = vpack.c.b16 %v745, %v743
    %v1006 = vpack.c.b16 %v748, %v746
    %v1007 = vpack.c.b16 %v749, %v747
    %v1008 = vpack.c.b16 %v752, %v750
    %v1009 = vpack.c.b16 %v753, %v751
    %v1010 = vpack.c.b16 %v756, %v754
    %v1011 = vpack.c.b16 %v757, %v755
    %v1012 = vpack.c.b16 %v760, %v758
    %v1013 = vpack.c.b16 %v761, %v759
    %v1014 = vpack.c.b16 %v764, %v762
    %v1015 = vpack.c.b16 %v765, %v763
    %v1016 = vpack.c.b16 %v768, %v766
    %v1017 = vpack.c.b16 %v769, %v767
    %v1018 = vpack.c.b16 %v772, %v770
    %v1019 = vpack.c.b16 %v773, %v771
    %v1020 = vpack.c.b16 %v776, %v774
    %v1021 = vpack.c.b16 %v777, %v775
    %v1022 = vpack.c.b16 %v780, %v778
    %v1023 = vpack.c.b16 %v781, %v779
    %v1024 = vpack.c.b16 %v784, %v782
    %v1025 = vpack.c.b16 %v785, %v783
    %v1026 = vpack.c.b16 %v788, %v786
    %v1027 = vpack.c.b16 %v789, %v787
    %v1028 = vpack.c.b16 %v792, %v790
    %v1029 = vpack.c.b16 %v793, %v791
    %v1030 = vpack.c.b16 %v796, %v794
    %v1031 = vpack.c.b16 %v797, %v795
    %v1032 = vpack.c.b16 %v800, %v798
    %v1033 = vpack.c.b16 %v801, %v799
    %v1034 = vpack.c.b16 %v804, %v802
    %v1035 = vpack.c.b16 %v805, %v803
    %v1036 = vpack.c.b16 %v808, %v806
    %v1037 = vpack.c.b16 %v809, %v807
    %v1038 = vpack.c.b16 %v812, %v810
    %v1039 = vpack.c.b16 %v813, %v811
    %v1040 = vpack.c.b16 %v816, %v814
    %v1041 = vpack.c.b16 %v817, %v815
    %v1042 = vpack.c.b16 %v820, %v818
    %v1043 = vpack.c.b16 %v821, %v819
    %v1044 = vpack.c.b16 %v824, %v822
    %v1045 = vpack.c.b16 %v825, %v823
    %v1046 = vpack.c.b16 %v828, %v826
    %v1047 = vpack.c.b16 %v829, %v827
    %v1048 = vpack.c.b16 %v832, %v830
    %v1049 = vpack.c.b16 %v833, %v831
    %v1050 = vpack.c.b16 %v836, %v834
    %v1051 = vpack.c.b16 %v837, %v835
    %v1052 = vpack.c.b16 %v840, %v838
    %v1053 = vpack.c.b16 %v841, %v839
    %v1054 = vpack.c.b16 %v844, %v842
    %v1055 = vpack.c.b16 %v845, %v843
    %v1056 = vpack.c.b16 %v848, %v846
    %v1057 = vpack.c.b16 %v849, %v847
    %v1058 = vpack.c.b16 %v852, %v850
    %v1059 = vpack.c.b16 %v853, %v851
    %v1060 = vpack.c.b16 %v856, %v854
    %v1061 = vpack.c.b16 %v857, %v855
    %v1062 = vpack.c.b16 %v860, %v858
    %v1063 = vpack.c.b16 %v861, %v859
    %v1064 = vpack.c.b16 %v864, %v862
    %v1065 = vpack.c.b16 %v865, %v863
    %v1066 = vpack.c.b16 %v868, %v866
    %v1067 = vpack.c.b16 %v869, %v867
    %v1068 = vpack.c.b16 %v872, %v870
    %v1069 = vpack.c.b16 %v873, %v871
    %v1070 = vpack.c.b16 %v876, %v874
    %v1071 = vpack.c.b16 %v877, %v875
    %v1072 = vpack.c.b16 %v880, %v878
    %v1073 = vpack.c.b16 %v881, %v879
    %1266 = vmatpush.bf16.msra.mxu0 %v896
    %1267 = vmatpush.bf16.msra.mxu0 %v894
    %1268 = vmatpush.bf16.msra.mxu0 %v892
    %1269 = vmatpush.bf16.msra.mxu0 %v890
    %1270 = vmatpush.bf16.msra.mxu0 %v888
    %1271 = vmatpush.bf16.msra.mxu0 %v886
    %1272 = vmatpush.bf16.msra.mxu0 %v884
    %1273 = vmatpush.bf16.msra.mxu0 %v882
    %1274 = vmatmul.bf16.gmra.mxu0 %v282
    %v1275 = vpop.f32.mrf.mxu0
    %v1276 = vadd.f32 %v260, %v1275
    %v1277 = vpop.f32.mrf.mxu0
    %1278 = vdwg.mxu0
    %1279 = vmatpush.bf16.msra.mxu0 %v912
    %1280 = vmatpush.bf16.msra.mxu0 %v910
    %1281 = vmatpush.bf16.msra.mxu0 %v908
    %1282 = vmatpush.bf16.msra.mxu0 %v906
    %1283 = vmatpush.bf16.msra.mxu0 %v904
    %1284 = vmatpush.bf16.msra.mxu0 %v902
    %1285 = vmatpush.bf16.msra.mxu0 %v900
    %1286 = vmatpush.bf16.msra.mxu0 %v898
    %1287 = vmatmul.bf16.gmra.mxu0 %v283
    %v1288 = vpop.f32.mrf.mxu0
    %v1289 = vadd.f32 %v1276, %v1288
    %v1290 = vpop.f32.mrf.mxu0
    %1291 = vdwg.mxu0
    %1292 = vmatpush.bf16.msra.mxu0 %v928
    %1293 = vmatpush.bf16.msra.mxu0 %v926
    %1294 = vmatpush.bf16.msra.mxu0 %v924
    %1295 = vmatpush.bf16.msra.mxu0 %v922
    %1296 = vmatpush.bf16.msra.mxu0 %v920
    %1297 = vmatpush.bf16.msra.mxu0 %v918
    %1298 = vmatpush.bf16.msra.mxu0 %v916
    %1299 = vmatpush.bf16.msra.mxu0 %v914
    %1300 = vmatmul.bf16.gmra.mxu0 %v284
    %v1301 = vpop.f32.mrf.mxu0
    %v1302 = vadd.f32 %v1289, %v1301
    %v1303 = vpop.f32.mrf.mxu0
    %1304 = vdwg.mxu0
    %1305 = vmatpush.bf16.msra.mxu0 %v944
    %1306 = vmatpush.bf16.msra.mxu0 %v942
    %1307 = vmatpush.bf16.msra.mxu0 %v940
    %1308 = vmatpush.bf16.msra.mxu0 %v938
    %1309 = vmatpush.bf16.msra.mxu0 %v936
    %1310 = vmatpush.bf16.msra.mxu0 %v934
    %1311 = vmatpush.bf16.msra.mxu0 %v932
    %1312 = vmatpush.bf16.msra.mxu0 %v930
    %1313 = vmatmul.bf16.gmra.mxu0 %v285
    %v1314 = vpop.f32.mrf.mxu0
    %v1315 = vadd.f32 %v1302, %v1314
    %v1316 = vpop.f32.mrf.mxu0
    %1317 = vdwg.mxu0
    %1318 = vmatpush.bf16.msra.mxu0 %v960
    %1319 = vmatpush.bf16.msra.mxu0 %v958
    %1320 = vmatpush.bf16.msra.mxu0 %v956
    %1321 = vmatpush.bf16.msra.mxu0 %v954
    %1322 = vmatpush.bf16.msra.mxu0 %v952
    %1323 = vmatpush.bf16.msra.mxu0 %v950
    %1324 = vmatpush.bf16.msra.mxu0 %v948
    %1325 = vmatpush.bf16.msra.mxu0 %v946
    %1326 = vmatmul.bf16.gmra.mxu0 %v286
    %v1327 = vpop.f32.mrf.mxu0
    %v1328 = vadd.f32 %v1315, %v1327
    %v1329 = vpop.f32.mrf.mxu0
    %1330 = vdwg.mxu0
    %1331 = vmatpush.bf16.msra.mxu0 %v976
    %1332 = vmatpush.bf16.msra.mxu0 %v974
    %1333 = vmatpush.bf16.msra.mxu0 %v972
    %1334 = vmatpush.bf16.msra.mxu0 %v970
    %1335 = vmatpush.bf16.msra.mxu0 %v968
    %1336 = vmatpush.bf16.msra.mxu0 %v966
    %1337 = vmatpush.bf16.msra.mxu0 %v964
    %1338 = vmatpush.bf16.msra.mxu0 %v962
    %1339 = vmatmul.bf16.gmra.mxu0 %v287
    %v1340 = vpop.f32.mrf.mxu0
    %v1341 = vadd.f32 %v1328, %v1340
    %v1342 = vpop.f32.mrf.mxu0
    %1343 = vdwg.mxu0
    %1344 = vmatpush.bf16.msra.mxu0 %v992
    %1345 = vmatpush.bf16.msra.mxu0 %v990
    %1346 = vmatpush.bf16.msra.mxu0 %v988
    %1347 = vmatpush.bf16.msra.mxu0 %v986
    %1348 = vmatpush.bf16.msra.mxu0 %v984
    %1349 = vmatpush.bf16.msra.mxu0 %v982
    %1350 = vmatpush.bf16.msra.mxu0 %v980
    %1351 = vmatpush.bf16.msra.mxu0 %v978
    %1352 = vmatmul.bf16.gmra.mxu0 %v288
    %v1353 = vpop.f32.mrf.mxu0
    %v1354 = vadd.f32 %v1341, %v1353
    %v1355 = vpop.f32.mrf.mxu0
    %1356 = vdwg.mxu0
    %1357 = vmatpush.bf16.msra.mxu0 %v1008
    %1358 = vmatpush.bf16.msra.mxu0 %v1006
    %1359 = vmatpush.bf16.msra.mxu0 %v1004
    %1360 = vmatpush.bf16.msra.mxu0 %v1002
    %1361 = vmatpush.bf16.msra.mxu0 %v1000
    %1362 = vmatpush.bf16.msra.mxu0 %v998
    %1363 = vmatpush.bf16.msra.mxu0 %v996
    %1364 = vmatpush.bf16.msra.mxu0 %v994
    %1365 = vmatmul.bf16.gmra.mxu0 %v289
    %v1366 = vpop.f32.mrf.mxu0
    %v1367 = vadd.f32 %v1354, %v1366
    %v1368 = vpop.f32.mrf.mxu0
    %1369 = vdwg.mxu0
    %1370 = vmatpush.bf16.msra.mxu0 %v1024
    %1371 = vmatpush.bf16.msra.mxu0 %v1022
    %1372 = vmatpush.bf16.msra.mxu0 %v1020
    %1373 = vmatpush.bf16.msra.mxu0 %v1018
    %1374 = vmatpush.bf16.msra.mxu0 %v1016
    %1375 = vmatpush.bf16.msra.mxu0 %v1014
    %1376 = vmatpush.bf16.msra.mxu0 %v1012
    %1377 = vmatpush.bf16.msra.mxu0 %v1010
    %1378 = vmatmul.bf16.gmra.mxu0 %v290
    %v1379 = vpop.f32.mrf.mxu0
    %v1380 = vadd.f32 %v1367, %v1379
    %v1381 = vpop.f32.mrf.mxu0
    %1382 = vdwg.mxu0
    %1383 = vmatpush.bf16.msra.mxu0 %v1040
    %1384 = vmatpush.bf16.msra.mxu0 %v1038
    %1385 = vmatpush.bf16.msra.mxu0 %v1036
    %1386 = vmatpush.bf16.msra.mxu0 %v1034
    %1387 = vmatpush.bf16.msra.mxu0 %v1032
    %1388 = vmatpush.bf16.msra.mxu0 %v1030
    %1389 = vmatpush.bf16.msra.mxu0 %v1028
    %1390 = vmatpush.bf16.msra.mxu0 %v1026
    %1391 = vmatmul.bf16.gmra.mxu0 %v291
    %v1392 = vpop.f32.mrf.mxu0
    %v1393 = vadd.f32 %v1380, %v1392
    %v1394 = vpop.f32.mrf.mxu0
    %1395 = vdwg.mxu0
    %1396 = vmatpush.bf16.msra.mxu0 %v1056
    %1397 = vmatpush.bf16.msra.mxu0 %v1054
    %1398 = vmatpush.bf16.msra.mxu0 %v1052
    %1399 = vmatpush.bf16.msra.mxu0 %v1050
    %1400 = vmatpush.bf16.msra.mxu0 %v1048
    %1401 = vmatpush.bf16.msra.mxu0 %v1046
    %1402 = vmatpush.bf16.msra.mxu0 %v1044
    %1403 = vmatpush.bf16.msra.mxu0 %v1042
    %1404 = vmatmul.bf16.gmra.mxu0 %v292
    %v1405 = vpop.f32.mrf.mxu0
    %v1406 = vadd.f32 %v1393, %v1405
    %v1407 = vpop.f32.mrf.mxu0
    %1408 = vdwg.mxu0
    %1409 = vmatpush.bf16.msra.mxu0 %v1072
    %1410 = vmatpush.bf16.msra.mxu0 %v1070
    %1411 = vmatpush.bf16.msra.mxu0 %v1068
    %1412 = vmatpush.bf16.msra.mxu0 %v1066
    %1413 = vmatpush.bf16.msra.mxu0 %v1064
    %1414 = vmatpush.bf16.msra.mxu0 %v1062
    %1415 = vmatpush.bf16.msra.mxu0 %v1060
    %1416 = vmatpush.bf16.msra.mxu0 %v1058
    %1417 = vmatmul.bf16.gmra.mxu0 %v293
    %v1418 = vpop.f32.mrf.mxu0
    %v1419 = vadd.f32 %v1406, %v1418
    %v1420 = vpop.f32.mrf.mxu0
    %1421 = vdwg.mxu0
    %1422 = vmatpush.bf16.msra.mxu0 %v897
    %1423 = vmatpush.bf16.msra.mxu0 %v895
    %1424 = vmatpush.bf16.msra.mxu0 %v893
    %1425 = vmatpush.bf16.msra.mxu0 %v891
    %1426 = vmatpush.bf16.msra.mxu0 %v889
    %1427 = vmatpush.bf16.msra.mxu0 %v887
    %1428 = vmatpush.bf16.msra.mxu0 %v885
    %1429 = vmatpush.bf16.msra.mxu0 %v883
    %1430 = vmatmul.bf16.gmra.mxu0 %v282
    %v1431 = vpop.f32.mrf.mxu0
    %v1432 = vadd.f32 %v261, %v1431
    %v1433 = vpop.f32.mrf.mxu0
    %1434 = vdwg.mxu0
    %1435 = vmatpush.bf16.msra.mxu0 %v913
    %1436 = vmatpush.bf16.msra.mxu0 %v911
    %1437 = vmatpush.bf16.msra.mxu0 %v909
    %1438 = vmatpush.bf16.msra.mxu0 %v907
    %1439 = vmatpush.bf16.msra.mxu0 %v905
    %1440 = vmatpush.bf16.msra.mxu0 %v903
    %1441 = vmatpush.bf16.msra.mxu0 %v901
    %1442 = vmatpush.bf16.msra.mxu0 %v899
    %1443 = vmatmul.bf16.gmra.mxu0 %v283
    %v1444 = vpop.f32.mrf.mxu0
    %v1445 = vadd.f32 %v1432, %v1444
    %v1446 = vpop.f32.mrf.mxu0
    %1447 = vdwg.mxu0
    %1448 = vmatpush.bf16.msra.mxu0 %v929
    %1449 = vmatpush.bf16.msra.mxu0 %v927
    %1450 = vmatpush.bf16.msra.mxu0 %v925
    %1451 = vmatpush.bf16.msra.mxu0 %v923
    %1452 = vmatpush.bf16.msra.mxu0 %v921
    %1453 = vmatpush.bf16.msra.mxu0 %v919
    %1454 = vmatpush.bf16.msra.mxu0 %v917
    %1455 = vmatpush.bf16.msra.mxu0 %v915
    %1456 = vmatmul.bf16.gmra.mxu0 %v284
    %v1457 = vpop.f32.mrf.mxu0
    %v1458 = vadd.f32 %v1445, %v1457
    %v1459 = vpop.f32.mrf.mxu0
    %1460 = vdwg.mxu0
    %1461 = vmatpush.bf16.msra.mxu0 %v945
    %1462 = vmatpush.bf16.msra.mxu0 %v943
    %1463 = vmatpush.bf16.msra.mxu0 %v941
    %1464 = vmatpush.bf16.msra.mxu0 %v939
    %1465 = vmatpush.bf16.msra.mxu0 %v937
    %1466 = vmatpush.bf16.msra.mxu0 %v935
    %1467 = vmatpush.bf16.msra.mxu0 %v933
    %1468 = vmatpush.bf16.msra.mxu0 %v931
    %1469 = vmatmul.bf16.gmra.mxu0 %v285
    %v1470 = vpop.f32.mrf.mxu0
    %v1471 = vadd.f32 %v1458, %v1470
    %v1472 = vpop.f32.mrf.mxu0
    %1473 = vdwg.mxu0
    %1474 = vmatpush.bf16.msra.mxu0 %v961
    %1475 = vmatpush.bf16.msra.mxu0 %v959
    %1476 = vmatpush.bf16.msra.mxu0 %v957
    %1477 = vmatpush.bf16.msra.mxu0 %v955
    %1478 = vmatpush.bf16.msra.mxu0 %v953
    %1479 = vmatpush.bf16.msra.mxu0 %v951
    %1480 = vmatpush.bf16.msra.mxu0 %v949
    %1481 = vmatpush.bf16.msra.mxu0 %v947
    %1482 = vmatmul.bf16.gmra.mxu0 %v286
    %v1483 = vpop.f32.mrf.mxu0
    %v1484 = vadd.f32 %v1471, %v1483
    %v1485 = vpop.f32.mrf.mxu0
    %1486 = vdwg.mxu0
    %1487 = vmatpush.bf16.msra.mxu0 %v977
    %1488 = vmatpush.bf16.msra.mxu0 %v975
    %1489 = vmatpush.bf16.msra.mxu0 %v973
    %1490 = vmatpush.bf16.msra.mxu0 %v971
    %1491 = vmatpush.bf16.msra.mxu0 %v969
    %1492 = vmatpush.bf16.msra.mxu0 %v967
    %1493 = vmatpush.bf16.msra.mxu0 %v965
    %1494 = vmatpush.bf16.msra.mxu0 %v963
    %1495 = vmatmul.bf16.gmra.mxu0 %v287
    %v1496 = vpop.f32.mrf.mxu0
    %v1497 = vadd.f32 %v1484, %v1496
    %v1498 = vpop.f32.mrf.mxu0
    %1499 = vdwg.mxu0
    %1500 = vmatpush.bf16.msra.mxu0 %v993
    %1501 = vmatpush.bf16.msra.mxu0 %v991
    %1502 = vmatpush.bf16.msra.mxu0 %v989
    %1503 = vmatpush.bf16.msra.mxu0 %v987
    %1504 = vmatpush.bf16.msra.mxu0 %v985
    %1505 = vmatpush.bf16.msra.mxu0 %v983
    %1506 = vmatpush.bf16.msra.mxu0 %v981
    %1507 = vmatpush.bf16.msra.mxu0 %v979
    %1508 = vmatmul.bf16.gmra.mxu0 %v288
    %v1509 = vpop.f32.mrf.mxu0
    %v1510 = vadd.f32 %v1497, %v1509
    %v1511 = vpop.f32.mrf.mxu0
    %1512 = vdwg.mxu0
    %1513 = vmatpush.bf16.msra.mxu0 %v1009
    %1514 = vmatpush.bf16.msra.mxu0 %v1007
    %1515 = vmatpush.bf16.msra.mxu0 %v1005
    %1516 = vmatpush.bf16.msra.mxu0 %v1003
    %1517 = vmatpush.bf16.msra.mxu0 %v1001
    %1518 = vmatpush.bf16.msra.mxu0 %v999
    %1519 = vmatpush.bf16.msra.mxu0 %v997
    %1520 = vmatpush.bf16.msra.mxu0 %v995
    %1521 = vmatmul.bf16.gmra.mxu0 %v289
    %v1522 = vpop.f32.mrf.mxu0
    %v1523 = vadd.f32 %v1510, %v1522
    %v1524 = vpop.f32.mrf.mxu0
    %1525 = vdwg.mxu0
    %1526 = vmatpush.bf16.msra.mxu0 %v1025
    %1527 = vmatpush.bf16.msra.mxu0 %v1023
    %1528 = vmatpush.bf16.msra.mxu0 %v1021
    %1529 = vmatpush.bf16.msra.mxu0 %v1019
    %1530 = vmatpush.bf16.msra.mxu0 %v1017
    %1531 = vmatpush.bf16.msra.mxu0 %v1015
    %1532 = vmatpush.bf16.msra.mxu0 %v1013
    %1533 = vmatpush.bf16.msra.mxu0 %v1011
    %1534 = vmatmul.bf16.gmra.mxu0 %v290
    %v1535 = vpop.f32.mrf.mxu0
    %v1536 = vadd.f32 %v1523, %v1535
    %v1537 = vpop.f32.mrf.mxu0
    %1538 = vdwg.mxu0
    %1539 = vmatpush.bf16.msra.mxu0 %v1041
    %1540 = vmatpush.bf16.msra.mxu0 %v1039
    %1541 = vmatpush.bf16.msra.mxu0 %v1037
    %1542 = vmatpush.bf16.msra.mxu0 %v1035
    %1543 = vmatpush.bf16.msra.mxu0 %v1033
    %1544 = vmatpush.bf16.msra.mxu0 %v1031
    %1545 = vmatpush.bf16.msra.mxu0 %v1029
    %1546 = vmatpush.bf16.msra.mxu0 %v1027
    %1547 = vmatmul.bf16.gmra.mxu0 %v291
    %v1548 = vpop.f32.mrf.mxu0
    %v1549 = vadd.f32 %v1536, %v1548
    %v1550 = vpop.f32.mrf.mxu0
    %1551 = vdwg.mxu0
    %1552 = vmatpush.bf16.msra.mxu0 %v1057
    %1553 = vmatpush.bf16.msra.mxu0 %v1055
    %1554 = vmatpush.bf16.msra.mxu0 %v1053
    %1555 = vmatpush.bf16.msra.mxu0 %v1051
    %1556 = vmatpush.bf16.msra.mxu0 %v1049
    %1557 = vmatpush.bf16.msra.mxu0 %v1047
    %1558 = vmatpush.bf16.msra.mxu0 %v1045
    %1559 = vmatpush.bf16.msra.mxu0 %v1043
    %1560 = vmatmul.bf16.gmra.mxu0 %v292
    %v1561 = vpop.f32.mrf.mxu0
    %v1562 = vadd.f32 %v1549, %v1561
    %v1563 = vpop.f32.mrf.mxu0
    %1564 = vdwg.mxu0
    %1565 = vmatpush.bf16.msra.mxu0 %v1073
    %1566 = vmatpush.bf16.msra.mxu0 %v1071
    %1567 = vmatpush.bf16.msra.mxu0 %v1069
    %1568 = vmatpush.bf16.msra.mxu0 %v1067
    %1569 = vmatpush.bf16.msra.mxu0 %v1065
    %1570 = vmatpush.bf16.msra.mxu0 %v1063
    %1571 = vmatpush.bf16.msra.mxu0 %v1061
    %1572 = vmatpush.bf16.msra.mxu0 %v1059
    %1573 = vmatmul.bf16.gmra.mxu0 %v293
    %v1574 = vpop.f32.mrf.mxu0
    %v1575 = vadd.f32 %v1562, %v1574
    %v1576 = vpop.f32.mrf.mxu0
    %1577 = vdwg.mxu0
    %v1578 = vmax.f32 %v1419, 0.0
    %v1579 = vmax.f32 %v1575, 0.0
    %v1580 = vpack.c.bf16 %v1578, %v1578
    %v1581 = vpack.c.bf16 %v1579, %v1579
    %v1582 = vld [vmem:[#allocation6] sm:$0xf]
    %v1583 = vld [vmem:[#allocation6 + $0x4] sm:$0xf]
    %v1584 = vld [vmem:[#allocation6 + $0x8] sm:$0xf]
    %v1585 = vld [vmem:[#allocation6 + $0xc] sm:$0xf]
    %v1586 = vld [vmem:[#allocation6 + $0x10] sm:$0xf]
    %v1587 = vld [vmem:[#allocation6 + $0x14] sm:$0xf]
    %v1588 = vld [vmem:[#allocation6 + $0x18] sm:$0xf]
    %v1589 = vld [vmem:[#allocation6 + $0x1c] sm:$0xf]
    %v1590 = vld [vmem:[#allocation6 + $0x20] sm:$0xf]
    %v1591 = vld [vmem:[#allocation6 + $0x24] sm:$0xf]
    %v1592 = vld [vmem:[#allocation6 + $0x28] sm:$0xf]
    %v1593 = vld [vmem:[#allocation6 + $0x2c] sm:$0xf]
    %v1594 = vld [vmem:[#allocation6 + $0x30] sm:$0xf]
    %v1595 = vld [vmem:[#allocation6 + $0x34] sm:$0xf]
    %v1596 = vld [vmem:[#allocation6 + $0x38] sm:$0xf]
    %v1597 = vld [vmem:[#allocation6 + $0x3c] sm:$0xf]
    %v1598 = vld [vmem:[#allocation6 + $0x40] sm:$0xf]
    %v1599 = vld [vmem:[#allocation6 + $0x44] sm:$0xf]
    %v1600 = vld [vmem:[#allocation6 + $0x48] sm:$0xf]
    %v1601 = vld [vmem:[#allocation6 + $0x4c] sm:$0xf]
    %v1602 = vld [vmem:[#allocation6 + $0x50] sm:$0xf]
    %v1603 = vld [vmem:[#allocation6 + $0x54] sm:$0xf]
    %v1604 = vld [vmem:[#allocation6 + $0x58] sm:$0xf]
    %v1605 = vld [vmem:[#allocation6 + $0x5c] sm:$0xf]
    %v1606 = vld [vmem:[#allocation6 + $0x60] sm:$0xf]
    %v1607 = vld [vmem:[#allocation6 + $0x64] sm:$0xf]
    %v1608 = vld [vmem:[#allocation6 + $0x68] sm:$0xf]
    %v1609 = vld [vmem:[#allocation6 + $0x6c] sm:$0xf]
    %v1610 = vld [vmem:[#allocation6 + $0x70] sm:$0xf]
    %v1611 = vld [vmem:[#allocation6 + $0x74] sm:$0xf]
    %v1612 = vld [vmem:[#allocation6 + $0x78] sm:$0xf]
    %v1613 = vld [vmem:[#allocation6 + $0x7c] sm:$0xf]
    %v1614 = vld [vmem:[%s5] sm:$0x1]
    %v1616 = vperm.slane %v1614, 0
    %v1650 = vunpack.c.l.b16 %v1582
    %v1651 = vunpack.c.l.b16 %v1583
    %v1652 = vunpack.c.l.b16 %v1584
    %v1653 = vunpack.c.l.b16 %v1585
    %v1654 = vunpack.c.l.b16 %v1586
    %v1655 = vunpack.c.l.b16 %v1587
    %v1656 = vunpack.c.l.b16 %v1588
    %v1657 = vunpack.c.l.b16 %v1589
    %v1658 = vunpack.c.l.b16 %v1590
    %v1659 = vunpack.c.l.b16 %v1591
    %v1660 = vunpack.c.l.b16 %v1592
    %v1661 = vunpack.c.l.b16 %v1593
    %v1662 = vunpack.c.l.b16 %v1594
    %v1663 = vunpack.c.l.b16 %v1595
    %v1664 = vunpack.c.l.b16 %v1596
    %v1665 = vunpack.c.l.b16 %v1597
    %v1666 = vunpack.c.l.b16 %v1598
    %v1667 = vunpack.c.l.b16 %v1599
    %v1668 = vunpack.c.l.b16 %v1600
    %v1669 = vunpack.c.l.b16 %v1601
    %v1670 = vunpack.c.l.b16 %v1602
    %v1671 = vunpack.c.l.b16 %v1603
    %v1672 = vunpack.c.l.b16 %v1604
    %v1673 = vunpack.c.l.b16 %v1605
    %v1674 = vunpack.c.l.b16 %v1606
    %v1675 = vunpack.c.l.b16 %v1607
    %v1676 = vunpack.c.l.b16 %v1608
    %v1677 = vunpack.c.l.b16 %v1609
    %v1678 = vunpack.c.l.b16 %v1610
    %v1679 = vunpack.c.l.b16 %v1611
    %v1680 = vunpack.c.l.b16 %v1612
    %v1681 = vunpack.c.l.b16 %v1613
    %v1682 = vpack.c.b16 %v1651, %v1650
    %v1683 = vpack.c.b16 %v1653, %v1652
    %v1684 = vpack.c.b16 %v1655, %v1654
    %v1685 = vpack.c.b16 %v1657, %v1656
    %v1686 = vpack.c.b16 %v1659, %v1658
    %v1687 = vpack.c.b16 %v1661, %v1660
    %v1688 = vpack.c.b16 %v1663, %v1662
    %v1689 = vpack.c.b16 %v1665, %v1664
    %v1690 = vpack.c.b16 %v1667, %v1666
    %v1691 = vpack.c.b16 %v1669, %v1668
    %v1692 = vpack.c.b16 %v1671, %v1670
    %v1693 = vpack.c.b16 %v1673, %v1672
    %v1694 = vpack.c.b16 %v1675, %v1674
    %v1695 = vpack.c.b16 %v1677, %v1676
    %v1696 = vpack.c.b16 %v1679, %v1678
    %v1697 = vpack.c.b16 %v1681, %v1680
    %1714 = vmatpush.bf16.msra.mxu0 %v1689
    %1715 = vmatpush.bf16.msra.mxu0 %v1688
    %1716 = vmatpush.bf16.msra.mxu0 %v1687
    %1717 = vmatpush.bf16.msra.mxu0 %v1686
    %1718 = vmatpush.bf16.msra.mxu0 %v1685
    %1719 = vmatpush.bf16.msra.mxu0 %v1684
    %1720 = vmatpush.bf16.msra.mxu0 %v1683
    %1721 = vmatpush.bf16.msra.mxu0 %v1682
    %1722 = vmatmul.bf16.gmra.mxu0 %v1580
    %v1723 = vpop.f32.mrf.mxu0
    %v1724 = vadd.f32 %v1616, %v1723
    %v1725 = vpop.f32.mrf.mxu0
    %1726 = vdwg.mxu0
    %1727 = vmatpush.bf16.msra.mxu0 %v1697
    %1728 = vmatpush.bf16.msra.mxu0 %v1696
    %1729 = vmatpush.bf16.msra.mxu0 %v1695
    %1730 = vmatpush.bf16.msra.mxu0 %v1694
    %1731 = vmatpush.bf16.msra.mxu0 %v1693
    %1732 = vmatpush.bf16.msra.mxu0 %v1692
    %1733 = vmatpush.bf16.msra.mxu0 %v1691
    %1734 = vmatpush.bf16.msra.mxu0 %v1690
    %1735 = vmatmul.bf16.gmra.mxu0 %v1581
    %v1736 = vpop.f32.mrf.mxu0
    %v1737 = vadd.f32 %v1724, %v1736
    %v1738 = vpop.f32.mrf.mxu0
    %1739 = vdwg.mxu0
    %v1740 = vmax.f32 %v1737, 0.0
    %s1741 = smul.u32 0, 8
    %s1742 = sld [smem:[#allocation3]]
    %v1743 = vlaneseq
    %v1744 = vshrl.u32 %v1743, 7
    %v1745 = vstv %s1741
    %v1746 = vadd.s32 %v1744, %v1745
    %v1747 = vlaneseq
    %v1748 = vand.u32 %v1747, 127
    %v1749 = vmul.u32 %v1746, 1000003
    %v1750 = vmul.u32 %v1748, 8191
    %v1751 = vadd.s32 %v1749, %v1750
    %s1752 = smul.u32 %s1742, 374761393
    %v1753 = vstv %s1752
    %v1754 = vadd.s32 %v1751, %v1753
    %v1755 = vshra.s32 %v1754, 16
    %v1756 = vand.u32 %v1755, 65535
    %v1757 = vxor.u32 %v1756, %v1754
    %v1758 = vmul.u32 %v1757, 73244475
    %v1759 = vshra.s32 %v1758, 16
    %v1760 = vand.u32 %v1759, 65535
    %v1761 = vxor.u32 %v1760, %v1758
    %v1762 = vmul.u32 %v1761, 73244475
    %v1763 = vshra.s32 %v1762, 16
    %v1764 = vand.u32 %v1763, 65535
    %v1765 = vxor.u32 %v1764, %v1762
    %v1766 = vand.u32 %v1765, 1
    %vm1767 = vcmp.eq.s32.totalorder %v1766, 0
    %v1768 = vmul.f32 %v1740, 2.0
    %v1769 = vsel %vm1767, %v1768, 0.0
    %v1770 = vpack.c.bf16 %v1769, %v1769
    %v1771 = vld [vmem:[%s6] sm:$0xf]
    %v1772 = vld [vmem:[%s6 + $0x4] sm:$0xf]
    %v1773 = vld [vmem:[%s6 + $0x8] sm:$0xf]
    %v1774 = vld [vmem:[%s6 + $0xc] sm:$0xf]
    %v1775 = vld [vmem:[%s6 + $0x10] sm:$0xf]
    %v1776 = vld [vmem:[%s6 + $0x14] sm:$0xf]
    %v1777 = vld [vmem:[%s6 + $0x18] sm:$0xf]
    %v1778 = vld [vmem:[%s6 + $0x1c] sm:$0xf]
    %v1779 = vld [vmem:[%s6 + $0x20] sm:$0xf]
    %v1780 = vld [vmem:[%s6 + $0x24] sm:$0xf]
    %v1781 = vld [vmem:[%s6 + $0x28] sm:$0xf]
    %v1782 = vld [vmem:[%s6 + $0x2c] sm:$0xf]
    %v1783 = vld [vmem:[%s6 + $0x30] sm:$0xf]
    %v1784 = vld [vmem:[%s6 + $0x34] sm:$0xf]
    %v1785 = vld [vmem:[%s6 + $0x38] sm:$0xf]
    %v1786 = vld [vmem:[%s6 + $0x3c] sm:$0xf]
    %v1787 = vld [vmem:[%s7] sm:$0x1]
    %v1789 = vperm.slane %v1787, 0
    %v1807 = vunpack.c.l.b16 %v1771
    %v1808 = vunpack.c.l.b16 %v1772
    %v1809 = vunpack.c.l.b16 %v1773
    %v1810 = vunpack.c.l.b16 %v1774
    %v1811 = vunpack.c.l.b16 %v1775
    %v1812 = vunpack.c.l.b16 %v1776
    %v1813 = vunpack.c.l.b16 %v1777
    %v1814 = vunpack.c.l.b16 %v1778
    %v1815 = vunpack.c.l.b16 %v1779
    %v1816 = vunpack.c.l.b16 %v1780
    %v1817 = vunpack.c.l.b16 %v1781
    %v1818 = vunpack.c.l.b16 %v1782
    %v1819 = vunpack.c.l.b16 %v1783
    %v1820 = vunpack.c.l.b16 %v1784
    %v1821 = vunpack.c.l.b16 %v1785
    %v1822 = vunpack.c.l.b16 %v1786
    %v1823 = vpack.c.b16 %v1808, %v1807
    %v1824 = vpack.c.b16 %v1810, %v1809
    %v1825 = vpack.c.b16 %v1812, %v1811
    %v1826 = vpack.c.b16 %v1814, %v1813
    %v1827 = vpack.c.b16 %v1816, %v1815
    %v1828 = vpack.c.b16 %v1818, %v1817
    %v1829 = vpack.c.b16 %v1820, %v1819
    %v1830 = vpack.c.b16 %v1822, %v1821
    %1839 = vmatpush.bf16.msra.mxu0 %v1830
    %1840 = vmatpush.bf16.msra.mxu0 %v1829
    %1841 = vmatpush.bf16.msra.mxu0 %v1828
    %1842 = vmatpush.bf16.msra.mxu0 %v1827
    %1843 = vmatpush.bf16.msra.mxu0 %v1826
    %1844 = vmatpush.bf16.msra.mxu0 %v1825
    %1845 = vmatpush.bf16.msra.mxu0 %v1824
    %1846 = vmatpush.bf16.msra.mxu0 %v1823
    %1847 = vmatmul.bf16.gmra.mxu0 %v1770
    %v1848 = vpop.f32.mrf.mxu0
    %v1849 = vadd.f32 %v1789, %v1848
    %v1850 = vpop.f32.mrf.mxu0
    %1851 = vdwg.mxu0
    %1852 = vst [vmem:[%s8] sm:$0xff] %v1849
    // Predicated region
    $region38: #{net_forward.1} parent=1 // pred_check
      _
    $region39: #{net_forward.1} parent=1 // pred_check_branch
      %1854 = sbr.rel (0) target = $region41
    $region40: #{net_forward.1} parent=1 // pred_region
      _
    $region41: #{net_forward.1} parent=1 // pred_fallthru
      _
    // Predicated region
    $region42: #{net_forward.1} parent=1 // pred_check
      _
    $region43: #{net_forward.1} parent=1 // pred_check_branch
      %1856 = sbr.rel (0) target = $region45
    $region44: #{net_forward.1} parent=1 // pred_region
      _
    $region45: #{net_forward.1} parent=1 // pred_fallthru
      _
    %1857 = vsyncpa [#allocation5], 1
    %1858 = vsyncpa [#allocation7], 1

</llo_original>
